<compile_context>
chip_gen: v7x
topology: tpu7x:2x2x1
jax: 0.10.0
libtpu: 0.0.40
codegen_flags: <defaults>
</compile_context>

<pallas_src>
import math
import numpy as np
import jax
import jax.numpy as jnp
from jax import lax
from jax.experimental import pallas as pl
from jax.experimental.pallas import tpu as pltpu

# Small problem sizes consistent with the module's forward pass.
BATCH = 2
S = 16              # spatial resolution (x)
WIDTH = 64          # FNO channel width
MODES = 8           # Fourier modes kept (<= S // 2 + 1)
TIME_HISTORY = 1
TIME_FUTURE = 1
HIDDEN = 128        # fc1 hidden size

BS = BATCH * S      # fused batch*space rows
MB = MODES * BATCH  # fused mode*batch rows of the spectral intermediates

_SQRT_2_OVER_PI = 0.7978845608028654


def _gelu_tanh(x):
    # tanh-approximate GELU (tanh -> EUP); differs from erf-GELU by <~1e-3.
    return 0.5 * x * (1.0 + jnp.tanh(_SQRT_2_OVER_PI * (x + 0.044715 * (x * x * x))))


# --------------------------------- kernel ----------------------------------

def fno1d_kernel(x_ref, fc0w_ref, fc0b_ref, fb_ref, icrb_ref, icib_ref,
                 wt_ref, wbot_ref, ww_ref, wcb_ref,
                 fc1w_ref, fc1b_ref, fc2w_ref, fc2b_ref,
                 o_ref, h_ref):
    f32 = jnp.float32
    bf16 = jnp.bfloat16
    layer = pl.program_id(0)
    last = pl.num_programs(0) - 1

    # fc0 (contraction K = 2): two broadcast FMAs on the VPU, no MXU push.
    @pl.when(layer == 0)
    def _():
        x = x_ref[...]                                                  # (BS, 2)
        h_ref[...] = (x[:, 0:1] * fc0w_ref[0:1, :]
                      + x[:, 1:2] * fc0w_ref[1:2, :]
                      + fc0b_ref[...])                                  # (BS, W)

    h = h_ref[...]                                                      # (BS, W) f32
    hb = h.astype(bf16)

    # ---- SpectralConv1d (both batch elements at once) ----
    # forward rDFT: one matmul with a block-diagonal-over-batch matrix.
    # Row order is mode-major then batch: r = m*B + b (real half first).
    xri = jnp.dot(fb_ref[...], hb, preferred_element_type=f32)         # (2*MB, W)
    xr3 = xri[:MB].reshape(MODES, BATCH, WIDTH).astype(bf16)           # (M, B, W)
    xi3 = xri[MB:].reshape(MODES, BATCH, WIDTH).astype(bf16)           # (M, B, W)
    # per-mode complex channel mixing, batched over modes on the MXU, with the
    # weight pre-split into halves (no lhs concat):
    #   [yr | yi] = xr @ [WR | WI]  +  xi @ [-WI | WR]
    dn = (((2,), (1,)), ((0,), (0,)))
    yri = (lax.dot_general(xr3, wt_ref[...], dn, preferred_element_type=f32)
           + lax.dot_general(xi3, wbot_ref[...], dn, preferred_element_type=f32))
    yflat = yri.reshape(MB, 2 * WIDTH)                                  # (MB, 2W)
    # inverse rDFT (modes >= MODES are zero), block-diagonal over batch,
    # real and imaginary contributions as two accumulated matmuls.
    x1 = (jnp.dot(icrb_ref[...], yflat[:, :WIDTH].astype(bf16),
                  preferred_element_type=f32)
          + jnp.dot(icib_ref[...], yflat[:, WIDTH:].astype(bf16),
                    preferred_element_type=f32))                       # (BS, W)

    # ---- 1x1 Conv1d == channel matmul + bias ----
    x2 = jnp.dot(hb, ww_ref[...], preferred_element_type=f32) + wcb_ref[...]
    hn = x1 + x2

    @pl.when(layer < last)
    def _():
        h_ref[...] = _gelu_tanh(hn)

    # final layer: no GELU, then project back fc1 -> gelu -> fc2 and store.
    @pl.when(layer == last)
    def _():
        z = jnp.dot(hn.astype(bf16), fc1w_ref[...],
                    preferred_element_type=f32) + fc1b_ref[...]         # (BS, 128)
        z = _gelu_tanh(z)
        o_ref[...] = (jnp.dot(z.astype(bf16), fc2w_ref[...],
                              preferred_element_type=f32) + fc2b_ref[...])


# ------------------------------ weight prep --------------------------------

def dft_matrices(s, modes):
    n = np.arange(s)[None, :]                 # (1, S)
    k = np.arange(modes)[:, None]             # (M, 1)
    ang = 2.0 * np.pi * k * n / s             # (M, S)
    cosT = np.cos(ang)                        # Re of exp(-i ang)
    sinT = -np.sin(ang)                       # Im of exp(-i ang)
    c = np.full((modes,), 2.0)
    c[0] = 1.0
    if s % 2 == 0 and modes > s // 2:
        c[s // 2] = 1.0
    icr = (c[:, None] * np.cos(ang) / s).T    # (S, M)
    ici = (-c[:, None] * np.sin(ang) / s).T   # (S, M)
    return (cosT.astype(np.float32), sinT.astype(np.float32),
            icr.astype(np.float32), ici.astype(np.float32))


def _round_bf16(a):
    # Round weights to bf16 once so kernel and references share exact values.
    return a.astype(jnp.bfloat16).astype(jnp.float32)


def make_params(key):
    keys = jax.random.split(key, 10)
    W, M, H = WIDTH, MODES, HIDDEN
    scale = 1.0 / (W * W)

    def uni(k, shape, bound):
        return jax.random.uniform(k, shape, jnp.float32, -bound, bound)

    p = {}
    # fc0: Linear(time_history + 1, width); stored (in, out); used in f32.
    p["fc0_w"] = uni(keys[0], (TIME_HISTORY + 1, W), 1.0 / np.sqrt(TIME_HISTORY + 1))
    p["fc0_b"] = uni(keys[1], (1, W), 1.0 / np.sqrt(TIME_HISTORY + 1))
    # 4 SpectralConv1d layers: complex weights as (layer, mode, in, out).
    p["wr"] = _round_bf16(scale * jax.random.uniform(keys[2], (4, M, W, W), jnp.float32))
    p["wi"] = _round_bf16(scale * jax.random.uniform(keys[3], (4, M, W, W), jnp.float32))
    # 4 pointwise Conv1d(width, width, 1): pre-transposed (layer, in, out).
    p["ww"] = _round_bf16(uni(keys[4], (4, W, W), 1.0 / np.sqrt(W)))
    p["wb"] = uni(keys[5], (4, 1, W), 1.0 / np.sqrt(W))
    # fc1 / fc2
    p["fc1_w"] = _round_bf16(uni(keys[6], (W, H), 1.0 / np.sqrt(W)))
    p["fc1_b"] = uni(keys[7], (1, H), 1.0 / np.sqrt(W))
    p["fc2_w"] = _round_bf16(uni(keys[8], (H, TIME_FUTURE), 1.0 / np.sqrt(H)))
    p["fc2_b"] = uni(keys[9], (1, TIME_FUTURE), 1.0 / np.sqrt(H))
    return p


def prepare_kernel_params(p):
    """One-time conversion of raw parameters into the exact layouts / dtypes
    the kernel consumes (hoisted out of the per-call jitted path)."""
    bf16 = jnp.bfloat16
    cosT, sinT, icr, ici = dft_matrices(S, MODES)
    # Block-diagonal-over-batch DFT matrices; spectral rows ordered mode-major
    # then batch (r = m*B + b) so the (M, B, W) regrouping in the kernel is a
    # plain sublane regrouping.
    fb = np.zeros((2 * MB, BS), np.float32)
    icrb = np.zeros((BS, MB), np.float32)
    icib = np.zeros((BS, MB), np.float32)
    for b in range(BATCH):
        cols = slice(b * S, (b + 1) * S)
        for m in range(MODES):
            r = m * BATCH + b
            fb[r, cols] = cosT[m]
            fb[MB + r, cols] = sinT[m]
            icrb[cols, r] = icr[:, m]
            icib[cols, r] = ici[:, m]
    wr, wi = p["wr"], p["wi"]                                   # (4, M, W, W)
    return {
        "fc0_w": p["fc0_w"], "fc0_b": p["fc0_b"],
        "fb": jnp.asarray(fb, bf16),                            # (2MB, BS)
        "icrb": jnp.asarray(icrb, bf16),                        # (BS, MB)
        "icib": jnp.asarray(icib, bf16),
        # per-mode complex mix split into halves: [WR|WI] and [-WI|WR]
        "wt": jnp.concatenate([wr, wi], axis=-1).astype(bf16),      # (4,M,W,2W)
        "wbot": jnp.concatenate([-wi, wr], axis=-1).astype(bf16),   # (4,M,W,2W)
        "ww": p["ww"].astype(bf16), "wcb": p["wb"],
        "fc1_w": p["fc1_w"].astype(bf16), "fc1_b": p["fc1_b"],
        "fc2_w": p["fc2_w"].astype(bf16), "fc2_b": p["fc2_b"],
    }


# ------------------------------ wrapper / glue ------------------------------

@jax.jit
def fno1d_forward_pallas(u, kp):
    B_, s, _ = u.shape
    assert B_ == BATCH and s == S
    gridx = jnp.broadcast_to(
        jnp.linspace(0.0, 1.0, s, dtype=jnp.float32)[None, :, None], (B_, s, 1))
    x = jnp.concatenate([u.astype(jnp.float32), gridx], axis=-1)
    x = x.reshape(B_ * s, TIME_HISTORY + 1)             # batch fused into rows

    W, M, TF = WIDTH, MODES, TIME_FUTURE

    def const_spec(arr):
        nd = arr.ndim
        return pl.BlockSpec(arr.shape, lambda l, _nd=nd: (0,) * _nd)

    in_specs = [
        const_spec(x),
        const_spec(kp["fc0_w"]), const_spec(kp["fc0_b"]),
        const_spec(kp["fb"]), const_spec(kp["icrb"]), const_spec(kp["icib"]),
        # per-layer spectral / conv weights: pipelined behind layer compute
        pl.BlockSpec((None, M, W, 2 * W), lambda l: (l, 0, 0, 0)),
        pl.BlockSpec((None, M, W, 2 * W), lambda l: (l, 0, 0, 0)),
        pl.BlockSpec((None, W, W), lambda l: (l, 0, 0)),
        pl.BlockSpec((None, 1, W), lambda l: (l, 0, 0)),
        const_spec(kp["fc1_w"]), const_spec(kp["fc1_b"]),
        const_spec(kp["fc2_w"]), const_spec(kp["fc2_b"]),
    ]

    out = pl.pallas_call(
        fno1d_kernel,
        grid=(4,),                                       # 4 FNO layers
        in_specs=in_specs,
        out_specs=pl.BlockSpec((BS, TF), lambda l: (0, 0)),
        out_shape=jax.ShapeDtypeStruct((BS, TF), jnp.float32),
        scratch_shapes=[pltpu.VMEM((BS, W), jnp.float32)],   # carried activation
        compiler_params=pltpu.CompilerParams(dimension_semantics=("arbitrary",)),
    )(x, kp["fc0_w"], kp["fc0_b"], kp["fb"], kp["icrb"], kp["icib"],
      kp["wt"], kp["wbot"], kp["ww"], kp["wcb"],
      kp["fc1_w"], kp["fc1_b"], kp["fc2_w"], kp["fc2_b"])
    return out.reshape(B_, s, TF)


# ------------------------- references for validation ------------------------

def _rb(a):
    return a.astype(jnp.bfloat16).astype(jnp.float32)


def fno1d_reference_jax(u, p):
    """Structure-independent reference (jnp.fft, PyTorch layout, tanh GELU).
    All dot math runs in f32 (operands bf16-rounded where the kernel rounds),
    so no bf16 dots ever hit the host backend."""
    f32 = jnp.float32
    gelu = lambda v: jax.nn.gelu(v, approximate=True)
    B_, s, _ = u.shape
    gridx = jnp.broadcast_to(
        jnp.linspace(0.0, 1.0, s, dtype=f32)[None, :, None], (B_, s, 1))
    x = jnp.concatenate([u.astype(f32), gridx], axis=-1)
    h = jnp.einsum("bsi,iw->bsw", x, p["fc0_w"]) + p["fc0_b"]       # f32 fc0
    h = jnp.transpose(h, (0, 2, 1))                                 # (B, W, S)
    for layer in range(4):
        hft = jnp.fft.rfft(_rb(h), axis=-1)                         # (B, W, S//2+1)
        hr = jnp.real(hft[:, :, :MODES])
        hi = jnp.imag(hft[:, :, :MODES])
        wr_l, wi_l = p["wr"][layer], p["wi"][layer]                 # (M, Wi, Wo)
        yr = (jnp.einsum("bik,kio->bok", hr, wr_l)
              - jnp.einsum("bik,kio->bok", hi, wi_l))
        yi = (jnp.einsum("bik,kio->bok", hr, wi_l)
              + jnp.einsum("bik,kio->bok", hi, wr_l))
        out_ft = jnp.zeros((B_, WIDTH, s // 2 + 1), jnp.complex64)
        out_ft = out_ft.at[:, :, :MODES].set(yr + 1j * yi)
        x1 = jnp.fft.irfft(out_ft, n=s, axis=-1)
        x2 = (jnp.einsum("bis,io->bos", _rb(h), p["ww"][layer])
              + p["wb"][layer][0][None, :, None])
        h = x1 + x2
        if layer < 3:
            h = gelu(h)
    h = jnp.transpose(h, (0, 2, 1))                                 # (B, S, W)
    h = gelu(jnp.dot(_rb(h), p["fc1_w"]) + p["fc1_b"])
    return jnp.dot(_rb(h), p["fc2_w"]) + p["fc2_b"]


_ERF = np.vectorize(math.erf)


def fno1d_reference_numpy(u, p):
    """Exact float64 reference (erf-GELU, full precision)."""
    f64 = lambda a: np.asarray(a, np.float64)

    def gelu(v):
        return 0.5 * v * (1.0 + _ERF(v / np.sqrt(2.0)))

    B_, s, _ = u.shape
    gridx = np.broadcast_to(np.linspace(0.0, 1.0, s)[None, :, None], (B_, s, 1))
    x = np.concatenate([f64(u), gridx], axis=-1)
    h = x @ f64(p["fc0_w"]) + f64(p["fc0_b"])
    h = np.transpose(h, (0, 2, 1))                                  # (B, W, S)
    for layer in range(4):
        hft = np.fft.rfft(h, axis=-1)
        wc = f64(p["wr"][layer]) + 1j * f64(p["wi"][layer])
        mixed = np.einsum("bik,kio->bok", hft[:, :, :MODES], wc)
        out_ft = np.zeros((B_, WIDTH, s // 2 + 1), np.complex128)
        out_ft[:, :, :MODES] = mixed
        x1 = np.fft.irfft(out_ft, n=s, axis=-1)
        x2 = (np.einsum("bis,io->bos", h, f64(p["ww"][layer]))
              + f64(p["wb"][layer][0])[None, :, None])
        h = x1 + x2
        if layer < 3:
            h = gelu(h)
    h = np.transpose(h, (0, 2, 1))
    h = gelu(h @ f64(p["fc1_w"]) + f64(p["fc1_b"]))
    return h @ f64(p["fc2_w"]) + f64(p["fc2_b"])


# ----------------------------------- main -----------------------------------

if __name__ == "__main__":
    key = jax.random.PRNGKey(0)
    pkey, ukey = jax.random.split(key)
    params = make_params(pkey)
    kparams = prepare_kernel_params(params)   # one-time, outside the jitted path
    u = jax.random.normal(ukey, (BATCH, S, TIME_HISTORY), jnp.float32)

    out = fno1d_forward_pallas(u, kparams)
    out = jax.block_until_ready(out)
    assert out.shape == (BATCH, S, TIME_FUTURE)

    out_np = np.asarray(out, np.float64)
    ref_a = np.asarray(fno1d_reference_jax(u, params), np.float64)
    ref_b = fno1d_reference_numpy(np.asarray(u), params)

    # matched-precision structural reference (jnp.fft, f32 math): tight check
    err_a = float(np.max(np.abs(out_np - ref_a)))
    assert err_a < 1e-2, f"mismatch vs matched-precision reference: {err_a}"
    # exact float64 reference: sanity bound covering bf16 + tanh-GELU approx
    err_b = float(np.max(np.abs(out_np - ref_b)))
    assert err_b < 5e-2, f"mismatch vs float64 reference: {err_b}"

    print("KERNEL_OK")
</pallas_src>

<mosaic_0001>
module attributes {stable_mosaic.version = 11 : i64} {
  func.func @fno1d_kernel(%arg0: i32, %arg1: memref<32x2xf32, #tpu.memory_space<vmem>>, %arg2: memref<2x64xf32, #tpu.memory_space<vmem>>, %arg3: memref<1x64xf32, #tpu.memory_space<vmem>>, %arg4: memref<32x32xbf16, #tpu.memory_space<vmem>>, %arg5: memref<32x16xbf16, #tpu.memory_space<vmem>>, %arg6: memref<32x16xbf16, #tpu.memory_space<vmem>>, %arg7: memref<1x8x64x128xbf16, #tpu.memory_space<vmem>>, %arg8: memref<1x8x64x128xbf16, #tpu.memory_space<vmem>>, %arg9: memref<1x64x64xbf16, #tpu.memory_space<vmem>>, %arg10: memref<1x1x64xf32, #tpu.memory_space<vmem>>, %arg11: memref<64x128xbf16, #tpu.memory_space<vmem>>, %arg12: memref<1x128xf32, #tpu.memory_space<vmem>>, %arg13: memref<128x1xbf16, #tpu.memory_space<vmem>>, %arg14: memref<1x1xf32, #tpu.memory_space<vmem>>, %arg15: memref<32x1xf32, #tpu.memory_space<vmem>>, %arg16: memref<32x64xf32, #tpu.memory_space<vmem>>) attributes {dimension_semantics = [#tpu.dimension_semantics<arbitrary>], iteration_bounds = array<i64: 4>, scalar_prefetch = 0 : i64, scratch_operands = 1 : i64, tpu.core_type = #tpu.core_type<tc>, window_params = [{pipeline_mode = #tpu.pipeline_mode<synchronous>, transform_indices = @transform_0, window_bounds = array<i64: 32, 2>}, {pipeline_mode = #tpu.pipeline_mode<synchronous>, transform_indices = @transform_1, window_bounds = array<i64: 2, 64>}, {pipeline_mode = #tpu.pipeline_mode<synchronous>, transform_indices = @transform_2, window_bounds = array<i64: 1, 64>}, {pipeline_mode = #tpu.pipeline_mode<synchronous>, transform_indices = @transform_3, window_bounds = array<i64: 32, 32>}, {pipeline_mode = #tpu.pipeline_mode<synchronous>, transform_indices = @transform_4, window_bounds = array<i64: 32, 16>}, {pipeline_mode = #tpu.pipeline_mode<synchronous>, transform_indices = @transform_5, window_bounds = array<i64: 32, 16>}, {transform_indices = @transform_6, window_bounds = array<i64: 1, 8, 64, 128>}, {transform_indices = @transform_7, window_bounds = array<i64: 1, 8, 64, 128>}, {transform_indices = @transform_8, window_bounds = array<i64: 1, 64, 64>}, {transform_indices = @transform_9, window_bounds = array<i64: 1, 1, 64>}, {pipeline_mode = #tpu.pipeline_mode<synchronous>, transform_indices = @transform_10, window_bounds = array<i64: 64, 128>}, {pipeline_mode = #tpu.pipeline_mode<synchronous>, transform_indices = @transform_11, window_bounds = array<i64: 1, 128>}, {pipeline_mode = #tpu.pipeline_mode<synchronous>, transform_indices = @transform_12, window_bounds = array<i64: 128, 1>}, {pipeline_mode = #tpu.pipeline_mode<synchronous>, transform_indices = @transform_13, window_bounds = array<i64: 1, 1>}, {pipeline_mode = #tpu.pipeline_mode<synchronous>, transform_indices = @transform_14, window_bounds = array<i64: 32, 1>}]} {
    %c0_i32 = arith.constant 0 : i32
    %0 = arith.cmpi eq, %arg0, %c0_i32 : i32
    %1 = arith.extui %0 : i1 to i32
    %c0_i32_0 = arith.constant 0 : i32
    %2 = arith.cmpi ne, %1, %c0_i32_0 : i32
    scf.if %2 {
      %c0_30 = arith.constant 0 : index
      %c0_31 = arith.constant 0 : index
      %44 = vector.load %arg1[%c0_30, %c0_31] : memref<32x2xf32, #tpu.memory_space<vmem>>, vector<32x2xf32>
      %45 = vector.extract_strided_slice %44 {offsets = [0, 0], sizes = [32, 1], strides = [1, 1]} : vector<32x2xf32> to vector<32x1xf32>
      %c0_32 = arith.constant 0 : index
      %c0_33 = arith.constant 0 : index
      %46 = vector.load %arg2[%c0_32, %c0_33] : memref<2x64xf32, #tpu.memory_space<vmem>>, vector<1x64xf32>
      %47 = vector.broadcast %45 : vector<32x1xf32> to vector<32x64xf32>
      %48 = vector.broadcast %46 : vector<1x64xf32> to vector<32x64xf32>
      %49 = arith.mulf %47, %48 : vector<32x64xf32>
      %50 = vector.extract_strided_slice %44 {offsets = [0, 1], sizes = [32, 1], strides = [1, 1]} : vector<32x2xf32> to vector<32x1xf32>
      %c1 = arith.constant 1 : index
      %c0_34 = arith.constant 0 : index
      %51 = vector.load %arg2[%c1, %c0_34] : memref<2x64xf32, #tpu.memory_space<vmem>>, vector<1x64xf32>
      %52 = vector.broadcast %50 : vector<32x1xf32> to vector<32x64xf32>
      %53 = vector.broadcast %51 : vector<1x64xf32> to vector<32x64xf32>
      %54 = arith.mulf %52, %53 : vector<32x64xf32>
      %55 = arith.addf %49, %54 : vector<32x64xf32>
      %c0_35 = arith.constant 0 : index
      %c0_36 = arith.constant 0 : index
      %56 = vector.load %arg3[%c0_35, %c0_36] : memref<1x64xf32, #tpu.memory_space<vmem>>, vector<1x64xf32>
      %57 = vector.broadcast %56 : vector<1x64xf32> to vector<32x64xf32>
      %58 = arith.addf %55, %57 : vector<32x64xf32>
      %c0_37 = arith.constant 0 : index
      %c0_38 = arith.constant 0 : index
      %59 = vector.load %arg16[%c0_37, %c0_38] : memref<32x64xf32, #tpu.memory_space<vmem>>, vector<32x64xf32>
      tpu.vector_store %arg16[%c0_37, %c0_38], %58 {strides = array<i32>} : memref<32x64xf32, #tpu.memory_space<vmem>>, vector<32x64xf32>,
    } else {
    }
    %c0 = arith.constant 0 : index
    %c0_1 = arith.constant 0 : index
    %3 = vector.load %arg16[%c0, %c0_1] : memref<32x64xf32, #tpu.memory_space<vmem>>, vector<32x64xf32>
    %4 = arith.truncf %3 : vector<32x64xf32> to vector<32x64xbf16>
    %c0_2 = arith.constant 0 : index
    %c0_3 = arith.constant 0 : index
    %5 = vector.load %arg4[%c0_2, %c0_3] : memref<32x32xbf16, #tpu.memory_space<vmem>>, vector<32x32xbf16>
    %cst = arith.constant dense<0.000000e+00> : vector<32x64xf32>
    %6 = tpu.matmul %5, %4, %cst {dimension_numbers = #tpu.dot_dimension_numbers<[1], [0], [0], [1], [0, 0, 1, 1], [], []>} : vector<32x32xbf16>, vector<32x64xbf16>, vector<32x64xf32> -> vector<32x64xf32>
    %7 = vector.extract_strided_slice %6 {offsets = [0, 0], sizes = [16, 64], strides = [1, 1]} : vector<32x64xf32> to vector<16x64xf32>
    %8 = vector.shape_cast %7 : vector<16x64xf32> to vector<8x2x64xf32>
    %9 = arith.truncf %8 : vector<8x2x64xf32> to vector<8x2x64xbf16>
    %10 = vector.extract_strided_slice %6 {offsets = [16, 0], sizes = [16, 64], strides = [1, 1]} : vector<32x64xf32> to vector<16x64xf32>
    %11 = vector.shape_cast %10 : vector<16x64xf32> to vector<8x2x64xf32>
    %12 = arith.truncf %11 : vector<8x2x64xf32> to vector<8x2x64xbf16>
    %c0_4 = arith.constant 0 : index
    %c0_5 = arith.constant 0 : index
    %c0_6 = arith.constant 0 : index
    %c0_7 = arith.constant 0 : index
    %13 = vector.load %arg7[%c0_4, %c0_5, %c0_6, %c0_7] : memref<1x8x64x128xbf16, #tpu.memory_space<vmem>>, vector<1x8x64x128xbf16>
    %14 = vector.shape_cast %13 : vector<1x8x64x128xbf16> to vector<8x64x128xbf16>
    %cst_8 = arith.constant dense<0.000000e+00> : vector<8x2x128xf32>
    %15 = tpu.matmul %9, %14, %cst_8 {dimension_numbers = #tpu.dot_dimension_numbers<[2], [1], [1], [2], [0, 0, 0, 1, 1, 2], [0], [0]>} : vector<8x2x64xbf16>, vector<8x64x128xbf16>, vector<8x2x128xf32> -> vector<8x2x128xf32>
    %c0_9 = arith.constant 0 : index
    %c0_10 = arith.constant 0 : index
    %c0_11 = arith.constant 0 : index
    %c0_12 = arith.constant 0 : index
    %16 = vector.load %arg8[%c0_9, %c0_10, %c0_11, %c0_12] : memref<1x8x64x128xbf16, #tpu.memory_space<vmem>>, vector<1x8x64x128xbf16>
    %17 = vector.shape_cast %16 : vector<1x8x64x128xbf16> to vector<8x64x128xbf16>
    %cst_13 = arith.constant dense<0.000000e+00> : vector<8x2x128xf32>
    %18 = tpu.matmul %12, %17, %cst_13 {dimension_numbers = #tpu.dot_dimension_numbers<[2], [1], [1], [2], [0, 0, 0, 1, 1, 2], [0], [0]>} : vector<8x2x64xbf16>, vector<8x64x128xbf16>, vector<8x2x128xf32> -> vector<8x2x128xf32>
    %19 = arith.addf %15, %18 : vector<8x2x128xf32>
    %20 = vector.shape_cast %19 : vector<8x2x128xf32> to vector<16x128xf32>
    %c0_14 = arith.constant 0 : index
    %c0_15 = arith.constant 0 : index
    %21 = vector.load %arg5[%c0_14, %c0_15] : memref<32x16xbf16, #tpu.memory_space<vmem>>, vector<32x16xbf16>
    %22 = vector.extract_strided_slice %20 {offsets = [0, 0], sizes = [16, 64], strides = [1, 1]} : vector<16x128xf32> to vector<16x64xf32>
    %23 = arith.truncf %22 : vector<16x64xf32> to vector<16x64xbf16>
    %cst_16 = arith.constant dense<0.000000e+00> : vector<32x64xf32>
    %24 = tpu.matmul %21, %23, %cst_16 {dimension_numbers = #tpu.dot_dimension_numbers<[1], [0], [0], [1], [0, 0, 1, 1], [], []>} : vector<32x16xbf16>, vector<16x64xbf16>, vector<32x64xf32> -> vector<32x64xf32>
    %c0_17 = arith.constant 0 : index
    %c0_18 = arith.constant 0 : index
    %25 = vector.load %arg6[%c0_17, %c0_18] : memref<32x16xbf16, #tpu.memory_space<vmem>>, vector<32x16xbf16>
    %26 = vector.extract_strided_slice %20 {offsets = [0, 64], sizes = [16, 64], strides = [1, 1]} : vector<16x128xf32> to vector<16x64xf32>
    %27 = arith.truncf %26 : vector<16x64xf32> to vector<16x64xbf16>
    %cst_19 = arith.constant dense<0.000000e+00> : vector<32x64xf32>
    %28 = tpu.matmul %25, %27, %cst_19 {dimension_numbers = #tpu.dot_dimension_numbers<[1], [0], [0], [1], [0, 0, 1, 1], [], []>} : vector<32x16xbf16>, vector<16x64xbf16>, vector<32x64xf32> -> vector<32x64xf32>
    %29 = arith.addf %24, %28 : vector<32x64xf32>
    %c0_20 = arith.constant 0 : index
    %c0_21 = arith.constant 0 : index
    %c0_22 = arith.constant 0 : index
    %30 = vector.load %arg9[%c0_20, %c0_21, %c0_22] : memref<1x64x64xbf16, #tpu.memory_space<vmem>>, vector<1x64x64xbf16>
    %31 = vector.shape_cast %30 : vector<1x64x64xbf16> to vector<64x64xbf16>
    %cst_23 = arith.constant dense<0.000000e+00> : vector<32x64xf32>
    %32 = tpu.matmul %4, %31, %cst_23 {dimension_numbers = #tpu.dot_dimension_numbers<[1], [0], [0], [1], [0, 0, 1, 1], [], []>} : vector<32x64xbf16>, vector<64x64xbf16>, vector<32x64xf32> -> vector<32x64xf32>
    %c0_24 = arith.constant 0 : index
    %c0_25 = arith.constant 0 : index
    %c0_26 = arith.constant 0 : index
    %33 = vector.load %arg10[%c0_24, %c0_25, %c0_26] : memref<1x1x64xf32, #tpu.memory_space<vmem>>, vector<1x1x64xf32>
    %34 = vector.shape_cast %33 : vector<1x1x64xf32> to vector<1x64xf32>
    %35 = vector.broadcast %34 : vector<1x64xf32> to vector<32x64xf32>
    %36 = arith.addf %32, %35 : vector<32x64xf32>
    %37 = arith.addf %29, %36 : vector<32x64xf32>
    %c3_i32 = arith.constant 3 : i32
    %38 = arith.cmpi slt, %arg0, %c3_i32 : i32
    %39 = arith.extui %38 : i1 to i32
    %c0_i32_27 = arith.constant 0 : i32
    %40 = arith.cmpi ne, %39, %c0_i32_27 : i32
    scf.if %40 {
      %cst_30 = arith.constant 5.000000e-01 : f32
      %44 = vector.broadcast %cst_30 : f32 to vector<32x64xf32>
      %45 = arith.mulf %44, %37 : vector<32x64xf32>
      %46 = arith.mulf %37, %37 : vector<32x64xf32>
      %47 = arith.mulf %46, %37 : vector<32x64xf32>
      %cst_31 = arith.constant 4.471500e-02 : f32
      %48 = vector.broadcast %cst_31 : f32 to vector<32x64xf32>
      %49 = arith.mulf %48, %47 : vector<32x64xf32>
      %50 = arith.addf %37, %49 : vector<32x64xf32>
      %cst_32 = arith.constant 0.797884583 : f32
      %51 = vector.broadcast %cst_32 : f32 to vector<32x64xf32>
      %52 = arith.mulf %51, %50 : vector<32x64xf32>
      %53 = math.tanh %52 : vector<32x64xf32>
      %cst_33 = arith.constant 1.000000e+00 : f32
      %54 = vector.broadcast %cst_33 : f32 to vector<32x64xf32>
      %55 = arith.addf %54, %53 : vector<32x64xf32>
      %56 = arith.mulf %45, %55 : vector<32x64xf32>
      %c0_34 = arith.constant 0 : index
      %c0_35 = arith.constant 0 : index
      %57 = vector.load %arg16[%c0_34, %c0_35] : memref<32x64xf32, #tpu.memory_space<vmem>>, vector<32x64xf32>
      tpu.vector_store %arg16[%c0_34, %c0_35], %56 {strides = array<i32>} : memref<32x64xf32, #tpu.memory_space<vmem>>, vector<32x64xf32>,
    } else {
    }
    %c3_i32_28 = arith.constant 3 : i32
    %41 = arith.cmpi eq, %arg0, %c3_i32_28 : i32
    %42 = arith.extui %41 : i1 to i32
    %c0_i32_29 = arith.constant 0 : i32
    %43 = arith.cmpi ne, %42, %c0_i32_29 : i32
    scf.if %43 {
      %44 = arith.truncf %37 : vector<32x64xf32> to vector<32x64xbf16>
      %c0_30 = arith.constant 0 : index
      %c0_31 = arith.constant 0 : index
      %45 = vector.load %arg11[%c0_30, %c0_31] : memref<64x128xbf16, #tpu.memory_space<vmem>>, vector<64x128xbf16>
      %cst_32 = arith.constant dense<0.000000e+00> : vector<32x128xf32>
      %46 = tpu.matmul %44, %45, %cst_32 {dimension_numbers = #tpu.dot_dimension_numbers<[1], [0], [0], [1], [0, 0, 1, 1], [], []>} : vector<32x64xbf16>, vector<64x128xbf16>, vector<32x128xf32> -> vector<32x128xf32>
      %c0_33 = arith.constant 0 : index
      %c0_34 = arith.constant 0 : index
      %47 = vector.load %arg12[%c0_33, %c0_34] : memref<1x128xf32, #tpu.memory_space<vmem>>, vector<1x128xf32>
      %48 = vector.broadcast %47 : vector<1x128xf32> to vector<32x128xf32>
      %49 = arith.addf %46, %48 : vector<32x128xf32>
      %cst_35 = arith.constant 5.000000e-01 : f32
      %50 = vector.broadcast %cst_35 : f32 to vector<32x128xf32>
      %51 = arith.mulf %50, %49 : vector<32x128xf32>
      %52 = arith.mulf %49, %49 : vector<32x128xf32>
      %53 = arith.mulf %52, %49 : vector<32x128xf32>
      %cst_36 = arith.constant 4.471500e-02 : f32
      %54 = vector.broadcast %cst_36 : f32 to vector<32x128xf32>
      %55 = arith.mulf %54, %53 : vector<32x128xf32>
      %56 = arith.addf %49, %55 : vector<32x128xf32>
      %cst_37 = arith.constant 0.797884583 : f32
      %57 = vector.broadcast %cst_37 : f32 to vector<32x128xf32>
      %58 = arith.mulf %57, %56 : vector<32x128xf32>
      %59 = math.tanh %58 : vector<32x128xf32>
      %cst_38 = arith.constant 1.000000e+00 : f32
      %60 = vector.broadcast %cst_38 : f32 to vector<32x128xf32>
      %61 = arith.addf %60, %59 : vector<32x128xf32>
      %62 = arith.mulf %51, %61 : vector<32x128xf32>
      %63 = arith.truncf %62 : vector<32x128xf32> to vector<32x128xbf16>
      %c0_39 = arith.constant 0 : index
      %c0_40 = arith.constant 0 : index
      %64 = vector.load %arg13[%c0_39, %c0_40] : memref<128x1xbf16, #tpu.memory_space<vmem>>, vector<128x1xbf16>
      %cst_41 = arith.constant dense<0.000000e+00> : vector<32x1xf32>
      %65 = tpu.matmul %63, %64, %cst_41 {dimension_numbers = #tpu.dot_dimension_numbers<[1], [0], [0], [1], [0, 0, 1, 1], [], []>} : vector<32x128xbf16>, vector<128x1xbf16>, vector<32x1xf32> -> vector<32x1xf32>
      %c0_42 = arith.constant 0 : index
      %c0_43 = arith.constant 0 : index
      %66 = vector.load %arg14[%c0_42, %c0_43] : memref<1x1xf32, #tpu.memory_space<vmem>>, vector<1x1xf32>
      %67 = vector.broadcast %66 : vector<1x1xf32> to vector<32x1xf32>
      %68 = arith.addf %65, %67 : vector<32x1xf32>
      %c0_44 = arith.constant 0 : index
      %c0_45 = arith.constant 0 : index
      %69 = vector.load %arg15[%c0_44, %c0_45] : memref<32x1xf32, #tpu.memory_space<vmem>>, vector<32x1xf32>
      tpu.vector_store %arg15[%c0_44, %c0_45], %68 {strides = array<i32>} : memref<32x1xf32, #tpu.memory_space<vmem>>, vector<32x1xf32>,
    } else {
    }
    return
  }
  func.func @transform_0(%arg0: i32) -> (i32, i32) {
    %c0_i32 = arith.constant 0 : i32
    %c0_i32_0 = arith.constant 0 : i32
    %c0_i32_1 = arith.constant 0 : i32
    return %c0_i32, %c0_i32_0 : i32, i32
  }
  func.func @transform_1(%arg0: i32) -> (i32, i32) {
    %c0_i32 = arith.constant 0 : i32
    %c0_i32_0 = arith.constant 0 : i32
    %c0_i32_1 = arith.constant 0 : i32
    return %c0_i32, %c0_i32_0 : i32, i32
  }
  func.func @transform_2(%arg0: i32) -> (i32, i32) {
    %c0_i32 = arith.constant 0 : i32
    %c0_i32_0 = arith.constant 0 : i32
    %c0_i32_1 = arith.constant 0 : i32
    return %c0_i32, %c0_i32_0 : i32, i32
  }
  func.func @transform_3(%arg0: i32) -> (i32, i32) {
    %c0_i32 = arith.constant 0 : i32
    %c0_i32_0 = arith.constant 0 : i32
    %c0_i32_1 = arith.constant 0 : i32
    return %c0_i32, %c0_i32_0 : i32, i32
  }
  func.func @transform_4(%arg0: i32) -> (i32, i32) {
    %c0_i32 = arith.constant 0 : i32
    %c0_i32_0 = arith.constant 0 : i32
    %c0_i32_1 = arith.constant 0 : i32
    return %c0_i32, %c0_i32_0 : i32, i32
  }
  func.func @transform_5(%arg0: i32) -> (i32, i32) {
    %c0_i32 = arith.constant 0 : i32
    %c0_i32_0 = arith.constant 0 : i32
    %c0_i32_1 = arith.constant 0 : i32
    return %c0_i32, %c0_i32_0 : i32, i32
  }
  func.func @transform_6(%arg0: i32) -> (i32, i32, i32, i32) {
    %c0_i32 = arith.constant 0 : i32
    %c0_i32_0 = arith.constant 0 : i32
    %c0_i32_1 = arith.constant 0 : i32
    %c0_i32_2 = arith.constant 0 : i32
    return %arg0, %c0_i32, %c0_i32_0, %c0_i32_1 : i32, i32, i32, i32
  }
  func.func @transform_7(%arg0: i32) -> (i32, i32, i32, i32) {
    %c0_i32 = arith.constant 0 : i32
    %c0_i32_0 = arith.constant 0 : i32
    %c0_i32_1 = arith.constant 0 : i32
    %c0_i32_2 = arith.constant 0 : i32
    return %arg0, %c0_i32, %c0_i32_0, %c0_i32_1 : i32, i32, i32, i32
  }
  func.func @transform_8(%arg0: i32) -> (i32, i32, i32) {
    %c0_i32 = arith.constant 0 : i32
    %c0_i32_0 = arith.constant 0 : i32
    %c0_i32_1 = arith.constant 0 : i32
    return %arg0, %c0_i32, %c0_i32_0 : i32, i32, i32
  }
  func.func @transform_9(%arg0: i32) -> (i32, i32, i32) {
    %c0_i32 = arith.constant 0 : i32
    %c0_i32_0 = arith.constant 0 : i32
    %c0_i32_1 = arith.constant 0 : i32
    return %arg0, %c0_i32, %c0_i32_0 : i32, i32, i32
  }
  func.func @transform_10(%arg0: i32) -> (i32, i32) {
    %c0_i32 = arith.constant 0 : i32
    %c0_i32_0 = arith.constant 0 : i32
    %c0_i32_1 = arith.constant 0 : i32
    return %c0_i32, %c0_i32_0 : i32, i32
  }
  func.func @transform_11(%arg0: i32) -> (i32, i32) {
    %c0_i32 = arith.constant 0 : i32
    %c0_i32_0 = arith.constant 0 : i32
    %c0_i32_1 = arith.constant 0 : i32
    return %c0_i32, %c0_i32_0 : i32, i32
  }
  func.func @transform_12(%arg0: i32) -> (i32, i32) {
    %c0_i32 = arith.constant 0 : i32
    %c0_i32_0 = arith.constant 0 : i32
    %c0_i32_1 = arith.constant 0 : i32
    return %c0_i32, %c0_i32_0 : i32, i32
  }
  func.func @transform_13(%arg0: i32) -> (i32, i32) {
    %c0_i32 = arith.constant 0 : i32
    %c0_i32_0 = arith.constant 0 : i32
    %c0_i32_1 = arith.constant 0 : i32
    return %c0_i32, %c0_i32_0 : i32, i32
  }
  func.func @transform_14(%arg0: i32) -> (i32, i32) {
    %c0_i32 = arith.constant 0 : i32
    %c0_i32_0 = arith.constant 0 : i32
    %c0_i32_1 = arith.constant 0 : i32
    return %c0_i32, %c0_i32_0 : i32, i32
  }
}

</mosaic_0001>

<llo_original>
// kernel: fno1d_forward_pallas.1
$region0: #{fno1d_forward_pallas.1}
  #allocation0 [shape = 'u32[]', space=smem, size = 0x4, offset = 0x4, fixed_abs, tag = 'smem constant byte address 0x4 - core index']
  #allocation1 [shape = 'u32[144,128]{1,0:T(1,128)}', space=vmem, size = 0x12000, scoped, tag = 'internal scratch']
  #allocation2 [shape = 'f32[32,64]{1,0:T(8,128)}', space=vmem, size = 0x4000, scoped, tag = 'scratch operand']
  #allocation3 [shape = 'f32[1,1]{1,0:T(1,128)S(1)}', space=vmem, size = 0x200, scoped, tag = 'scoped memory for fno1d_forward_pallas.1']
  %s0 = inlined_call_operand.vmem [shape: f32[32,2], index: 0, kind: input, shape index: {}]
  %s1 = inlined_call_operand.vmem [shape: f32[2,64], index: 1, kind: input, shape index: {}]
  %s2 = inlined_call_operand.vmem [shape: f32[1,64], index: 2, kind: input, shape index: {}]
  %s3 = inlined_call_operand.vmem [shape: bf16[32,32], index: 3, kind: input, shape index: {}]
  %s4 = inlined_call_operand.vmem [shape: bf16[32,16], index: 4, kind: input, shape index: {}]
  %s5 = inlined_call_operand.vmem [shape: bf16[32,16], index: 5, kind: input, shape index: {}]
  %s6 = inlined_call_operand.hbm [shape: bf16[4,8,64,128], index: 6, kind: input, shape index: {}]
  %s7 = inlined_call_operand.hbm [shape: bf16[4,8,64,128], index: 7, kind: input, shape index: {}]
  %s8 = inlined_call_operand.vmem [shape: bf16[4,64,64], index: 8, kind: input, shape index: {}]
  %s9 = inlined_call_operand.vmem [shape: f32[4,1,64], index: 9, kind: input, shape index: {}]
  %s10 = inlined_call_operand.vmem [shape: bf16[64,128], index: 10, kind: input, shape index: {}]
  %s11 = inlined_call_operand.vmem [shape: f32[1,128], index: 11, kind: input, shape index: {}]
  %s12 = inlined_call_operand.vmem [shape: bf16[128,1], index: 12, kind: input, shape index: {}]
  %s13 = inlined_call_operand.<no memory space> [shape: f32[1,1], index: 13, kind: input, shape index: {}]
  %s14 = inlined_call_operand.vmem [shape: f32[32,1], index: 14, kind: output, shape index: {}]
  %s15 = sld [smem:[#allocation0]]
  $region109: #{fno1d_forward_pallas.1} parent=0
    _
  %s17 = ssub.s32 1, %s15
  %s18 = scalar_select 0, %s17, %s15
  %v19 = vstv %s13
  %20 = vst [vmem:[#allocation3] sm:$0x1] %v19
  $region1: #{fno1d_forward_pallas.1} parent=0
    #allocation4 [shape = 'u8[262144]{0}', space=vmem, size = 0x40000, scoped, tag = 'input window, operand 6']
    #allocation5 [shape = 's32[2]{0}', space=sflag, size = 0x8, scoped, tag = 'scoped memory for fno1d_forward_pallas.1']
    #allocation6 [shape = 'u8[262144]{0}', space=vmem, size = 0x40000, scoped, tag = 'input window, operand 7']
    #allocation7 [shape = 's32[2]{0}', space=sflag, size = 0x8, scoped, tag = 'scoped memory for fno1d_forward_pallas.1']
    %21 = vsyncpa [#allocation5], 0
    %s22 = scalar_lea.sflag [#allocation5], 1
    %23 = vsyncpa %s22, 0
    %24 = vsyncpa [#allocation7], 0
    %s25 = scalar_lea.sflag [#allocation7], 1
    %26 = vsyncpa %s25, 0
    loop: start=0, step=1, limit=6
    $region2: #{fno1d_forward_pallas.1} parent=1 // loop_pre_header
      _
    $region3: #{fno1d_forward_pallas.1} parent=1 // loop_header
      %s28 = sphi 0, %s32
      %p29 = scmp.ge.s32.totalorder %s28, 6
      %s36 = sphi 0, %s36
      %s38 = sphi 0, %s36
      %s39 = sphi 0, %s38
      %s53 = sphi 0, %s39
      %s57 = sphi 0, %s57
      %s59 = sphi 0, %s57
      %s60 = sphi 0, %s59
      %s74 = sphi 0, %s60
      %s78 = sphi 0, %s78
      %s80 = sphi 0, %s78
      %s81 = sphi 0, %s80
      %s95 = sphi 0, %s81
      %s99 = sphi 0, %s99
      %s101 = sphi 0, %s99
      %s102 = sphi 0, %s101
      %s116 = sphi 0, %s102
      %s120 = sphi 0, %s120
      %s122 = sphi 0, %s120
      %s123 = sphi 0, %s122
      %s137 = sphi 0, %s123
      %s141 = sphi 0, %s141
      %s143 = sphi 0, %s141
      %s144 = sphi 0, %s143
      %s158 = sphi 0, %s144
      %s164 = sphi 0, %s166
      %s167 = sphi 0, %s164
      %s168 = sphi 0, %s167
      %s184 = sphi 0, %s168
      %s190 = sphi 0, %s192
      %s193 = sphi 0, %s190
      %s194 = sphi 0, %s193
      %s210 = sphi 0, %s194
      %s216 = sphi 0, %s218
      %s219 = sphi 0, %s216
      %s220 = sphi 0, %s219
      %s236 = sphi 0, %s220
      %s242 = sphi 0, %s244
      %s245 = sphi 0, %s242
      %s246 = sphi 0, %s245
      %s262 = sphi 0, %s246
      %s266 = sphi 0, %s266
      %s268 = sphi 0, %s266
      %s269 = sphi 0, %s268
      %s283 = sphi 0, %s269
      %s287 = sphi 0, %s287
      %s289 = sphi 0, %s287
      %s290 = sphi 0, %s289
      %s304 = sphi 0, %s290
      %s308 = sphi 0, %s308
      %s310 = sphi 0, %s308
      %s311 = sphi 0, %s310
      %s325 = sphi 0, %s311
      %s329 = sphi 0, %s329
      %s331 = sphi 0, %s329
      %s332 = sphi 0, %s331
      %s346 = sphi 0, %s332
      %s350 = sphi 0, %s350
      %s352 = sphi 0, %s350
      %s353 = sphi 0, %s352
      %s367 = sphi 0, %s353
    $region4: #{fno1d_forward_pallas.1} parent=1 // loop_header_branch
      %31 = sbr.rel (%p29) target = $region8
    $region5: #{fno1d_forward_pallas.1} parent=1 // loop_body
      %s33 = ssub.s32 %s28, 1
      %s34 = ssub.s32 %s28, 2
      %s35 = sadd.s32 %s28, 1
      %s37 = sadd.s32 %s36, 1
      %p40 = scmp.eq.s32.totalorder %s28, 3
      %p41 = scmp.ne.s32.totalorder %s36, %s38
      %p42 = scmp.eq.s32.totalorder %s28, 0
      %p43 = por %p41, %p42
      %p44 = scmp.ne.s32.totalorder %s36, %s38
      %p45 = scmp.eq.s32.totalorder %s33, 3
      %p46 = por %p44, %p45
      %p47 = scmp.ne.s32.totalorder %s38, %s39
      %p48 = scmp.eq.s32.totalorder %s33, 0
      %p49 = por %p47, %p48
      %p50 = scmp.ne.s32.totalorder %s38, %s39
      %p51 = scmp.eq.s32.totalorder %s34, 3
      %p52 = por %p50, %p51
      %p54 = scmp.ne.s32.totalorder %s39, %s53
      %p55 = scmp.eq.s32.totalorder %s34, 0
      %p56 = por %p54, %p55
      %s58 = sadd.s32 %s57, 1
      %p61 = scmp.eq.s32.totalorder %s28, 3
      %p62 = scmp.ne.s32.totalorder %s57, %s59
      %p63 = scmp.eq.s32.totalorder %s28, 0
      %p64 = por %p62, %p63
      %p65 = scmp.ne.s32.totalorder %s57, %s59
      %p66 = scmp.eq.s32.totalorder %s33, 3
      %p67 = por %p65, %p66
      %p68 = scmp.ne.s32.totalorder %s59, %s60
      %p69 = scmp.eq.s32.totalorder %s33, 0
      %p70 = por %p68, %p69
      %p71 = scmp.ne.s32.totalorder %s59, %s60
      %p72 = scmp.eq.s32.totalorder %s34, 3
      %p73 = por %p71, %p72
      %p75 = scmp.ne.s32.totalorder %s60, %s74
      %p76 = scmp.eq.s32.totalorder %s34, 0
      %p77 = por %p75, %p76
      %s79 = sadd.s32 %s78, 1
      %p82 = scmp.eq.s32.totalorder %s28, 3
      %p83 = scmp.ne.s32.totalorder %s78, %s80
      %p84 = scmp.eq.s32.totalorder %s28, 0
      %p85 = por %p83, %p84
      %p86 = scmp.ne.s32.totalorder %s78, %s80
      %p87 = scmp.eq.s32.totalorder %s33, 3
      %p88 = por %p86, %p87
      %p89 = scmp.ne.s32.totalorder %s80, %s81
      %p90 = scmp.eq.s32.totalorder %s33, 0
      %p91 = por %p89, %p90
      %p92 = scmp.ne.s32.totalorder %s80, %s81
      %p93 = scmp.eq.s32.totalorder %s34, 3
      %p94 = por %p92, %p93
      %p96 = scmp.ne.s32.totalorder %s81, %s95
      %p97 = scmp.eq.s32.totalorder %s34, 0
      %p98 = por %p96, %p97
      %s100 = sadd.s32 %s99, 1
      %p103 = scmp.eq.s32.totalorder %s28, 3
      %p104 = scmp.ne.s32.totalorder %s99, %s101
      %p105 = scmp.eq.s32.totalorder %s28, 0
      %p106 = por %p104, %p105
      %p107 = scmp.ne.s32.totalorder %s99, %s101
      %p108 = scmp.eq.s32.totalorder %s33, 3
      %p109 = por %p107, %p108
      %p110 = scmp.ne.s32.totalorder %s101, %s102
      %p111 = scmp.eq.s32.totalorder %s33, 0
      %p112 = por %p110, %p111
      %p113 = scmp.ne.s32.totalorder %s101, %s102
      %p114 = scmp.eq.s32.totalorder %s34, 3
      %p115 = por %p113, %p114
      %p117 = scmp.ne.s32.totalorder %s102, %s116
      %p118 = scmp.eq.s32.totalorder %s34, 0
      %p119 = por %p117, %p118
      %s121 = sadd.s32 %s120, 1
      %p124 = scmp.eq.s32.totalorder %s28, 3
      %p125 = scmp.ne.s32.totalorder %s120, %s122
      %p126 = scmp.eq.s32.totalorder %s28, 0
      %p127 = por %p125, %p126
      %p128 = scmp.ne.s32.totalorder %s120, %s122
      %p129 = scmp.eq.s32.totalorder %s33, 3
      %p130 = por %p128, %p129
      %p131 = scmp.ne.s32.totalorder %s122, %s123
      %p132 = scmp.eq.s32.totalorder %s33, 0
      %p133 = por %p131, %p132
      %p134 = scmp.ne.s32.totalorder %s122, %s123
      %p135 = scmp.eq.s32.totalorder %s34, 3
      %p136 = por %p134, %p135
      %p138 = scmp.ne.s32.totalorder %s123, %s137
      %p139 = scmp.eq.s32.totalorder %s34, 0
      %p140 = por %p138, %p139
      %s142 = sadd.s32 %s141, 1
      %p145 = scmp.eq.s32.totalorder %s28, 3
      %p146 = scmp.ne.s32.totalorder %s141, %s143
      %p147 = scmp.eq.s32.totalorder %s28, 0
      %p148 = por %p146, %p147
      %p149 = scmp.ne.s32.totalorder %s141, %s143
      %p150 = scmp.eq.s32.totalorder %s33, 3
      %p151 = por %p149, %p150
      %p152 = scmp.ne.s32.totalorder %s143, %s144
      %p153 = scmp.eq.s32.totalorder %s33, 0
      %p154 = por %p152, %p153
      %p155 = scmp.ne.s32.totalorder %s143, %s144
      %p156 = scmp.eq.s32.totalorder %s34, 3
      %p157 = por %p155, %p156
      %p159 = scmp.ne.s32.totalorder %s144, %s158
      %p160 = scmp.eq.s32.totalorder %s34, 0
      %p161 = por %p159, %p160
      %s162 = ssub.s32 %s28, %s35
      %p163 = scmp.eq.s32.totalorder %s162, 0
      %s165 = sadd.s32 %s164, 1
      %s166 = scalar_select %p163, %s164, %s165
      %p169 = pneg %p163
      %p170 = scmp.eq.s32.totalorder %s28, 3
      %p171 = por %p169, %p170
      %p172 = scmp.ne.s32.totalorder %s164, %s167
      %p173 = scmp.eq.s32.totalorder %s28, 0
      %p174 = por %p172, %p173
      %p175 = scmp.ne.s32.totalorder %s164, %s167
      %p176 = scmp.eq.s32.totalorder %s33, 3
      %p177 = por %p175, %p176
      %p178 = scmp.ne.s32.totalorder %s167, %s168
      %p179 = scmp.eq.s32.totalorder %s33, 0
      %p180 = por %p178, %p179
      %p181 = scmp.ne.s32.totalorder %s167, %s168
      %p182 = scmp.eq.s32.totalorder %s34, 3
      %p183 = por %p181, %p182
      %p185 = scmp.ne.s32.totalorder %s168, %s184
      %p186 = scmp.eq.s32.totalorder %s34, 0
      %p187 = por %p185, %p186
      %s188 = ssub.s32 %s28, %s35
      %p189 = scmp.eq.s32.totalorder %s188, 0
      %s191 = sadd.s32 %s190, 1
      %s192 = scalar_select %p189, %s190, %s191
      %p195 = pneg %p189
      %p196 = scmp.eq.s32.totalorder %s28, 3
      %p197 = por %p195, %p196
      %p198 = scmp.ne.s32.totalorder %s190, %s193
      %p199 = scmp.eq.s32.totalorder %s28, 0
      %p200 = por %p198, %p199
      %p201 = scmp.ne.s32.totalorder %s190, %s193
      %p202 = scmp.eq.s32.totalorder %s33, 3
      %p203 = por %p201, %p202
      %p204 = scmp.ne.s32.totalorder %s193, %s194
      %p205 = scmp.eq.s32.totalorder %s33, 0
      %p206 = por %p204, %p205
      %p207 = scmp.ne.s32.totalorder %s193, %s194
      %p208 = scmp.eq.s32.totalorder %s34, 3
      %p209 = por %p207, %p208
      %p211 = scmp.ne.s32.totalorder %s194, %s210
      %p212 = scmp.eq.s32.totalorder %s34, 0
      %p213 = por %p211, %p212
      %s214 = ssub.s32 %s28, %s35
      %p215 = scmp.eq.s32.totalorder %s214, 0
      %s217 = sadd.s32 %s216, 1
      %s218 = scalar_select %p215, %s216, %s217
      %p221 = pneg %p215
      %p222 = scmp.eq.s32.totalorder %s28, 3
      %p223 = por %p221, %p222
      %p224 = scmp.ne.s32.totalorder %s216, %s219
      %p225 = scmp.eq.s32.totalorder %s28, 0
      %p226 = por %p224, %p225
      %p227 = scmp.ne.s32.totalorder %s216, %s219
      %p228 = scmp.eq.s32.totalorder %s33, 3
      %p229 = por %p227, %p228
      %p230 = scmp.ne.s32.totalorder %s219, %s220
      %p231 = scmp.eq.s32.totalorder %s33, 0
      %p232 = por %p230, %p231
      %p233 = scmp.ne.s32.totalorder %s219, %s220
      %p234 = scmp.eq.s32.totalorder %s34, 3
      %p235 = por %p233, %p234
      %p237 = scmp.ne.s32.totalorder %s220, %s236
      %p238 = scmp.eq.s32.totalorder %s34, 0
      %p239 = por %p237, %p238
      %s240 = ssub.s32 %s28, %s35
      %p241 = scmp.eq.s32.totalorder %s240, 0
      %s243 = sadd.s32 %s242, 1
      %s244 = scalar_select %p241, %s242, %s243
      %p247 = pneg %p241
      %p248 = scmp.eq.s32.totalorder %s28, 3
      %p249 = por %p247, %p248
      %p250 = scmp.ne.s32.totalorder %s242, %s245
      %p251 = scmp.eq.s32.totalorder %s28, 0
      %p252 = por %p250, %p251
      %p253 = scmp.ne.s32.totalorder %s242, %s245
      %p254 = scmp.eq.s32.totalorder %s33, 3
      %p255 = por %p253, %p254
      %p256 = scmp.ne.s32.totalorder %s245, %s246
      %p257 = scmp.eq.s32.totalorder %s33, 0
      %p258 = por %p256, %p257
      %p259 = scmp.ne.s32.totalorder %s245, %s246
      %p260 = scmp.eq.s32.totalorder %s34, 3
      %p261 = por %p259, %p260
      %p263 = scmp.ne.s32.totalorder %s246, %s262
      %p264 = scmp.eq.s32.totalorder %s34, 0
      %p265 = por %p263, %p264
      %s267 = sadd.s32 %s266, 1
      %p270 = scmp.eq.s32.totalorder %s28, 3
      %p271 = scmp.ne.s32.totalorder %s266, %s268
      %p272 = scmp.eq.s32.totalorder %s28, 0
      %p273 = por %p271, %p272
      %p274 = scmp.ne.s32.totalorder %s266, %s268
      %p275 = scmp.eq.s32.totalorder %s33, 3
      %p276 = por %p274, %p275
      %p277 = scmp.ne.s32.totalorder %s268, %s269
      %p278 = scmp.eq.s32.totalorder %s33, 0
      %p279 = por %p277, %p278
      %p280 = scmp.ne.s32.totalorder %s268, %s269
      %p281 = scmp.eq.s32.totalorder %s34, 3
      %p282 = por %p280, %p281
      %p284 = scmp.ne.s32.totalorder %s269, %s283
      %p285 = scmp.eq.s32.totalorder %s34, 0
      %p286 = por %p284, %p285
      %s288 = sadd.s32 %s287, 1
      %p291 = scmp.eq.s32.totalorder %s28, 3
      %p292 = scmp.ne.s32.totalorder %s287, %s289
      %p293 = scmp.eq.s32.totalorder %s28, 0
      %p294 = por %p292, %p293
      %p295 = scmp.ne.s32.totalorder %s287, %s289
      %p296 = scmp.eq.s32.totalorder %s33, 3
      %p297 = por %p295, %p296
      %p298 = scmp.ne.s32.totalorder %s289, %s290
      %p299 = scmp.eq.s32.totalorder %s33, 0
      %p300 = por %p298, %p299
      %p301 = scmp.ne.s32.totalorder %s289, %s290
      %p302 = scmp.eq.s32.totalorder %s34, 3
      %p303 = por %p301, %p302
      %p305 = scmp.ne.s32.totalorder %s290, %s304
      %p306 = scmp.eq.s32.totalorder %s34, 0
      %p307 = por %p305, %p306
      %s309 = sadd.s32 %s308, 1
      %p312 = scmp.eq.s32.totalorder %s28, 3
      %p313 = scmp.ne.s32.totalorder %s308, %s310
      %p314 = scmp.eq.s32.totalorder %s28, 0
      %p315 = por %p313, %p314
      %p316 = scmp.ne.s32.totalorder %s308, %s310
      %p317 = scmp.eq.s32.totalorder %s33, 3
      %p318 = por %p316, %p317
      %p319 = scmp.ne.s32.totalorder %s310, %s311
      %p320 = scmp.eq.s32.totalorder %s33, 0
      %p321 = por %p319, %p320
      %p322 = scmp.ne.s32.totalorder %s310, %s311
      %p323 = scmp.eq.s32.totalorder %s34, 3
      %p324 = por %p322, %p323
      %p326 = scmp.ne.s32.totalorder %s311, %s325
      %p327 = scmp.eq.s32.totalorder %s34, 0
      %p328 = por %p326, %p327
      %s330 = sadd.s32 %s329, 1
      %p333 = scmp.eq.s32.totalorder %s28, 3
      %p334 = scmp.ne.s32.totalorder %s329, %s331
      %p335 = scmp.eq.s32.totalorder %s28, 0
      %p336 = por %p334, %p335
      %p337 = scmp.ne.s32.totalorder %s329, %s331
      %p338 = scmp.eq.s32.totalorder %s33, 3
      %p339 = por %p337, %p338
      %p340 = scmp.ne.s32.totalorder %s331, %s332
      %p341 = scmp.eq.s32.totalorder %s33, 0
      %p342 = por %p340, %p341
      %p343 = scmp.ne.s32.totalorder %s331, %s332
      %p344 = scmp.eq.s32.totalorder %s34, 3
      %p345 = por %p343, %p344
      %p347 = scmp.ne.s32.totalorder %s332, %s346
      %p348 = scmp.eq.s32.totalorder %s34, 0
      %p349 = por %p347, %p348
      %s351 = sadd.s32 %s350, 1
      %p354 = scmp.eq.s32.totalorder %s28, 3
      %p355 = scmp.ne.s32.totalorder %s350, %s352
      %p356 = scmp.eq.s32.totalorder %s28, 0
      %p357 = por %p355, %p356
      %p358 = scmp.ne.s32.totalorder %s350, %s352
      %p359 = scmp.eq.s32.totalorder %s33, 3
      %p360 = por %p358, %p359
      %p361 = scmp.ne.s32.totalorder %s352, %s353
      %p362 = scmp.eq.s32.totalorder %s33, 0
      %p363 = por %p361, %p362
      %p364 = scmp.ne.s32.totalorder %s352, %s353
      %p365 = scmp.eq.s32.totalorder %s34, 3
      %p366 = por %p364, %p365
      %p368 = scmp.ne.s32.totalorder %s353, %s367
      %p369 = scmp.eq.s32.totalorder %s34, 0
      %p370 = por %p368, %p369
      %p371 = scmp.le.s32.totalorder 1, %s28
      %p372 = scmp.lt.s32.totalorder %s28, 5
      %p373 = pnand %p371, %p372
      %p374 = pneg %p373
      // Predicated region
      $region9: #{fno1d_forward_pallas.1} parent=5 // pred_check
        _
      $region10: #{fno1d_forward_pallas.1} parent=5 // pred_check_branch
        %376 = sbr.rel (%p373) target = $region12
      $region11: #{fno1d_forward_pallas.1} parent=5 // pred_region
        %s377 = ssub.s32 %s28, 1
        // Predicated region
        $region13: #{fno1d_forward_pallas.1} parent=11 // pred_check
          %p378 = pneg %p49
        $region14: #{fno1d_forward_pallas.1} parent=11 // pred_check_branch
          %380 = sbr.rel (%p378) target = $region16
        $region15: #{fno1d_forward_pallas.1} parent=11 // pred_region
          _
        $region16: #{fno1d_forward_pallas.1} parent=11 // pred_fallthru
          _
        // Predicated region
        $region17: #{fno1d_forward_pallas.1} parent=11 // pred_check
          %p381 = pneg %p70
        $region18: #{fno1d_forward_pallas.1} parent=11 // pred_check_branch
          %383 = sbr.rel (%p381) target = $region20
        $region19: #{fno1d_forward_pallas.1} parent=11 // pred_region
          _
        $region20: #{fno1d_forward_pallas.1} parent=11 // pred_fallthru
          _
        // Predicated region
        $region21: #{fno1d_forward_pallas.1} parent=11 // pred_check
          %p384 = pneg %p91
        $region22: #{fno1d_forward_pallas.1} parent=11 // pred_check_branch
          %386 = sbr.rel (%p384) target = $region24
        $region23: #{fno1d_forward_pallas.1} parent=11 // pred_region
          _
        $region24: #{fno1d_forward_pallas.1} parent=11 // pred_fallthru
          _
        // Predicated region
        $region25: #{fno1d_forward_pallas.1} parent=11 // pred_check
          %p387 = pneg %p112
        $region26: #{fno1d_forward_pallas.1} parent=11 // pred_check_branch
          %389 = sbr.rel (%p387) target = $region28
        $region27: #{fno1d_forward_pallas.1} parent=11 // pred_region
          _
        $region28: #{fno1d_forward_pallas.1} parent=11 // pred_fallthru
          _
        // Predicated region
        $region29: #{fno1d_forward_pallas.1} parent=11 // pred_check
          %p390 = pneg %p133
        $region30: #{fno1d_forward_pallas.1} parent=11 // pred_check_branch
          %392 = sbr.rel (%p390) target = $region32
        $region31: #{fno1d_forward_pallas.1} parent=11 // pred_region
          _
        $region32: #{fno1d_forward_pallas.1} parent=11 // pred_fallthru
          _
        // Predicated region
        $region33: #{fno1d_forward_pallas.1} parent=11 // pred_check
          %p393 = pneg %p154
        $region34: #{fno1d_forward_pallas.1} parent=11 // pred_check_branch
          %395 = sbr.rel (%p393) target = $region36
        $region35: #{fno1d_forward_pallas.1} parent=11 // pred_region
          _
        $region36: #{fno1d_forward_pallas.1} parent=11 // pred_fallthru
          _
        // Predicated region
        $region37: #{fno1d_forward_pallas.1} parent=11 // pred_check
          %p396 = pneg %p279
        $region38: #{fno1d_forward_pallas.1} parent=11 // pred_check_branch
          %398 = sbr.rel (%p396) target = $region40
        $region39: #{fno1d_forward_pallas.1} parent=11 // pred_region
          _
        $region40: #{fno1d_forward_pallas.1} parent=11 // pred_fallthru
          _
        // Predicated region
        $region41: #{fno1d_forward_pallas.1} parent=11 // pred_check
          %p399 = pneg %p300
        $region42: #{fno1d_forward_pallas.1} parent=11 // pred_check_branch
          %401 = sbr.rel (%p399) target = $region44
        $region43: #{fno1d_forward_pallas.1} parent=11 // pred_region
          _
        $region44: #{fno1d_forward_pallas.1} parent=11 // pred_fallthru
          _
        // Predicated region
        $region45: #{fno1d_forward_pallas.1} parent=11 // pred_check
          %p402 = pneg %p321
        $region46: #{fno1d_forward_pallas.1} parent=11 // pred_check_branch
          %404 = sbr.rel (%p402) target = $region48
        $region47: #{fno1d_forward_pallas.1} parent=11 // pred_region
          _
        $region48: #{fno1d_forward_pallas.1} parent=11 // pred_fallthru
          _
        // Predicated region
        $region49: #{fno1d_forward_pallas.1} parent=11 // pred_check
          %p405 = pneg %p342
        $region50: #{fno1d_forward_pallas.1} parent=11 // pred_check_branch
          %407 = sbr.rel (%p405) target = $region52
        $region51: #{fno1d_forward_pallas.1} parent=11 // pred_region
          _
        $region52: #{fno1d_forward_pallas.1} parent=11 // pred_fallthru
          _
      $region12: #{fno1d_forward_pallas.1} parent=5 // pred_fallthru
        _
      %p408 = scmp.lt.s32.totalorder %s28, 4
      // Predicated region
      $region53: #{fno1d_forward_pallas.1} parent=5 // pred_check
        %p409 = pneg %p408
      $region54: #{fno1d_forward_pallas.1} parent=5 // pred_check_branch
        %411 = sbr.rel (%p409) target = $region56
      $region55: #{fno1d_forward_pallas.1} parent=5 // pred_region
        // Predicated region
        $region57: #{fno1d_forward_pallas.1} parent=55 // pred_check
          %p412 = pneg %p174
        $region58: #{fno1d_forward_pallas.1} parent=55 // pred_check_branch
          %414 = sbr.rel (%p412) target = $region60
        $region59: #{fno1d_forward_pallas.1} parent=55 // pred_region
          %s415 = sand.u32 %s164, 1
          %s416 = scalar_lea.sflag [#allocation5], %s415
          %s417 = sand.u32 %s164, 1
          %s418 = smul.addr %s417, 256
          %s419 = scalar_lea.vmem [#allocation4], %s418
          %s421 = ssub.s32 4096, 4096
          %422 = vsyncadd %s416, %s421
          %s423 = smul.addr %s28, 64
          %s424 = smul.addr %s423, 64
          %s425 = scalar_lea.hbm %s6, %s424
          %s426 = sshll.u32 %s419, 4
          %s427 = int_to_ptr.vmem [resolvable:$true] %s426
          %432 = dma.hbm_to_vmem [thread:$0]  %s425, 4096, %s427, %s416, 64, 64, 4
        $region60: #{fno1d_forward_pallas.1} parent=55 // pred_fallthru
          _
        // Predicated region
        $region61: #{fno1d_forward_pallas.1} parent=55 // pred_check
          %p433 = pneg %p200
        $region62: #{fno1d_forward_pallas.1} parent=55 // pred_check_branch
          %435 = sbr.rel (%p433) target = $region64
        $region63: #{fno1d_forward_pallas.1} parent=55 // pred_region
          %s436 = sand.u32 %s190, 1
          %s437 = scalar_lea.sflag [#allocation7], %s436
          %s438 = sand.u32 %s190, 1
          %s439 = smul.addr %s438, 256
          %s440 = scalar_lea.vmem [#allocation6], %s439
          %s442 = ssub.s32 4096, 4096
          %443 = vsyncadd %s437, %s442
          %s444 = smul.addr %s28, 64
          %s445 = smul.addr %s444, 64
          %s446 = scalar_lea.hbm %s7, %s445
          %s447 = sshll.u32 %s440, 4
          %s448 = int_to_ptr.vmem [resolvable:$true] %s447
          %453 = dma.hbm_to_vmem [thread:$0]  %s446, 4096, %s448, %s437, 64, 64, 4
        $region64: #{fno1d_forward_pallas.1} parent=55 // pred_fallthru
          _
        // Predicated region
        $region65: #{fno1d_forward_pallas.1} parent=55 // pred_check
          %p454 = pneg %p226
        $region66: #{fno1d_forward_pallas.1} parent=55 // pred_check_branch
          %456 = sbr.rel (%p454) target = $region68
        $region67: #{fno1d_forward_pallas.1} parent=55 // pred_region
          %p457 = scmp.lt.s32.totalorder %s28, 3
          %s458 = scalar_select %p457, %s28, 3
          %s459 = smul.addr %s458, 8
          %s460 = smul.addr %s459, 4
          %s461 = scalar_lea.vmem %s8, %s460
        $region68: #{fno1d_forward_pallas.1} parent=55 // pred_fallthru
          _
        // Predicated region
        $region69: #{fno1d_forward_pallas.1} parent=55 // pred_check
          %p462 = pneg %p252
        $region70: #{fno1d_forward_pallas.1} parent=55 // pred_check_branch
          %464 = sbr.rel (%p462) target = $region72
        $region71: #{fno1d_forward_pallas.1} parent=55 // pred_region
          %p465 = scmp.lt.s32.totalorder %s28, 3
          %s466 = scalar_select %p465, %s28, 3
          %s467 = scalar_lea.vmem %s9, %s466
        $region72: #{fno1d_forward_pallas.1} parent=55 // pred_fallthru
          _
      $region56: #{fno1d_forward_pallas.1} parent=5 // pred_fallthru
        _
      %p468 = scmp.le.s32.totalorder 1, %s28
      %p469 = scmp.lt.s32.totalorder %s28, 5
      %p470 = pnand %p468, %p469
      %p471 = pneg %p470
      // Predicated region
      $region73: #{fno1d_forward_pallas.1} parent=5 // pred_check
        _
      $region74: #{fno1d_forward_pallas.1} parent=5 // pred_check_branch
        %473 = sbr.rel (%p470) target = $region76
      $region75: #{fno1d_forward_pallas.1} parent=5 // pred_region
        %s474 = ssub.s32 %s28, 1
        %s475 = sand.u32 %s167, 1
        %s476 = scalar_lea.sflag [#allocation5], %s475
        %s477 = sand.u32 %s167, 1
        %s478 = smul.addr %s477, 256
        %s479 = scalar_lea.vmem [#allocation4], %s478
        // Predicated region
        $region77: #{fno1d_forward_pallas.1} parent=75 // pred_check
          %p480 = pneg %p180
        $region78: #{fno1d_forward_pallas.1} parent=75 // pred_check_branch
          %482 = sbr.rel (%p480) target = $region80
        $region79: #{fno1d_forward_pallas.1} parent=75 // pred_region
          %483 = dma.done %s476, 4096
        $region80: #{fno1d_forward_pallas.1} parent=75 // pred_fallthru
          _
        %s484 = sand.u32 %s193, 1
        %s485 = scalar_lea.sflag [#allocation7], %s484
        %s486 = sand.u32 %s193, 1
        %s487 = smul.addr %s486, 256
        %s488 = scalar_lea.vmem [#allocation6], %s487
        // Predicated region
        $region81: #{fno1d_forward_pallas.1} parent=75 // pred_check
          %p489 = pneg %p206
        $region82: #{fno1d_forward_pallas.1} parent=75 // pred_check_branch
          %491 = sbr.rel (%p489) target = $region84
        $region83: #{fno1d_forward_pallas.1} parent=75 // pred_region
          %492 = dma.done %s485, 4096
        $region84: #{fno1d_forward_pallas.1} parent=75 // pred_fallthru
          _
        %p493 = pneg %p49
        %p494 = pneg %p46
        %p495 = pneg %p70
        %p496 = pneg %p67
        %p497 = pneg %p91
        %p498 = pneg %p88
        %p499 = pneg %p112
        %p500 = pneg %p109
        %p501 = pneg %p133
        %p502 = pneg %p130
        %p503 = pneg %p154
        %p504 = pneg %p151
        %s505 = sand.u32 %s167, 1
        %s506 = scalar_lea.sflag [#allocation5], %s505
        %s507 = sand.u32 %s167, 1
        %s508 = smul.addr %s507, 256
        %s509 = scalar_lea.vmem [#allocation4], %s508
        %p510 = pneg %p180
        %p511 = pneg %p177
        %s512 = sand.u32 %s193, 1
        %s513 = scalar_lea.sflag [#allocation7], %s512
        %s514 = sand.u32 %s193, 1
        %s515 = smul.addr %s514, 256
        %s516 = scalar_lea.vmem [#allocation6], %s515
        %p517 = pneg %p206
        %p518 = pneg %p203
        %p519 = scmp.lt.s32.totalorder %s33, 3
        %s520 = scalar_select %p519, %s33, 3
        %s521 = smul.addr %s520, 8
        %s522 = smul.addr %s521, 4
        %s523 = scalar_lea.vmem %s8, %s522
        %p524 = pneg %p232
        %p525 = pneg %p229
        %p526 = scmp.lt.s32.totalorder %s33, 3
        %s527 = scalar_select %p526, %s33, 3
        %s528 = scalar_lea.vmem %s9, %s527
        %p529 = pneg %p258
        %p530 = pneg %p255
        %p531 = pneg %p279
        %p532 = pneg %p276
        %p533 = pneg %p300
        %p534 = pneg %p297
        %p535 = pneg %p321
        %p536 = pneg %p318
        %p537 = pneg %p342
        %p538 = pneg %p339
        %p539 = pneg %p363
        %p540 = pneg %p360
        %p541 = scmp.lt.s32.totalorder %s33, 3
        %s542 = scalar_select %p541, %s33, 3
        %s543 = smul.addr %s542, 8
        %s544 = smul.addr %s543, 4
        %s545 = scalar_lea.vmem %s8, %s544
        %p546 = scmp.lt.s32.totalorder %s33, 3
        %s547 = scalar_select %p546, %s33, 3
        %s548 = scalar_lea.vmem %s9, %s547
        %p550 = scmp.eq.s32.totalorder %s33, 0
        // Predicated region
        $region85: #{fno1d_forward_pallas.1} parent=75 // pred_check
          %p551 = pneg %p550
        $region86: #{fno1d_forward_pallas.1} parent=75 // pred_check_branch
          %553 = sbr.rel (%p551) target = $region88
        $region87: #{fno1d_forward_pallas.1} parent=75 // pred_region
          %v554 = vld [vmem:[%s0] sm:$0xff]
          %v555 = vld [vmem:[%s0 + $0x8] sm:$0xff]
          %v556 = vld [vmem:[%s0 + $0x10] sm:$0xff]
          %v557 = vld [vmem:[%s0 + $0x18] sm:$0xff]
          %v558 = vld [vmem:[%s1] sm:$0x1]
          %560 = vset.pattern.permute.xlu0 0
          %561 = vperm.xlu0 %560, %v554
          %v562 = vpop.permute.xlu0 %561
          %565 = vset.pattern.permute.xlu0 0
          %566 = vperm.xlu0 %565, %v555
          %v567 = vpop.permute.xlu0 %566
          %570 = vset.pattern.permute.xlu0 0
          %571 = vperm.xlu0 %570, %v556
          %v572 = vpop.permute.xlu0 %571
          %575 = vset.pattern.permute.xlu0 0
          %576 = vperm.xlu0 %575, %v557
          %v577 = vpop.permute.xlu0 %576
          %v579 = vlaneseq
          %v580 = vshrl.u32 %v579, 7
          %v581 = vsub.s32 0, %v580
          %v582 = vrot.slane %v558, %v581
          %v583 = vmul.f32 %v562, %v582
          %v584 = vmul.f32 %v567, %v582
          %v585 = vmul.f32 %v572, %v582
          %v586 = vmul.f32 %v577, %v582
          %v587 = vld [vmem:[%s1 + $0x1] sm:$0x1]
          %588 = vset.pattern.permute.xlu0 1
          %589 = vperm.xlu0 %588, %v554
          %v590 = vpop.permute.xlu0 %589
          %592 = vset.pattern.permute.xlu0 1
          %593 = vperm.xlu0 %592, %v555
          %v594 = vpop.permute.xlu0 %593
          %596 = vset.pattern.permute.xlu0 1
          %597 = vperm.xlu0 %596, %v556
          %v598 = vpop.permute.xlu0 %597
          %600 = vset.pattern.permute.xlu0 1
          %601 = vperm.xlu0 %600, %v557
          %v602 = vpop.permute.xlu0 %601
          %v604 = vlaneseq
          %v605 = vshrl.u32 %v604, 7
          %v606 = vsub.s32 0, %v605
          %v607 = vrot.slane %v587, %v606
          %v608 = vmul.f32 %v590, %v607
          %v609 = vmul.f32 %v594, %v607
          %v610 = vmul.f32 %v598, %v607
          %v611 = vmul.f32 %v602, %v607
          %v612 = vadd.f32 %v583, %v608
          %v613 = vadd.f32 %v584, %v609
          %v614 = vadd.f32 %v585, %v610
          %v615 = vadd.f32 %v586, %v611
          %v616 = vld [vmem:[%s2] sm:$0x1]
          %v618 = vlaneseq
          %v619 = vshrl.u32 %v618, 7
          %v620 = vsub.s32 0, %v619
          %v621 = vrot.slane %v616, %v620
          %v623 = vadd.f32 %v612, %v621
          %v624 = vadd.f32 %v613, %v621
          %v625 = vadd.f32 %v614, %v621
          %v626 = vadd.f32 %v615, %v621
          %vm627 = vcmask 523264
          %628 = vst.msk [vmem:[#allocation2] sm:$0xff] %vm627, %v623
          %629 = vst.msk [vmem:[#allocation2 + $0x8] sm:$0xff] %vm627, %v624
          %630 = vst.msk [vmem:[#allocation2 + $0x10] sm:$0xff] %vm627, %v625
          %631 = vst.msk [vmem:[#allocation2 + $0x18] sm:$0xff] %vm627, %v626
        $region88: #{fno1d_forward_pallas.1} parent=75 // pred_fallthru
          _
        %v632 = vld [vmem:[#allocation2] sm:$0xff]
        %v633 = vld [vmem:[#allocation2 + $0x8] sm:$0xff]
        %v634 = vld [vmem:[#allocation2 + $0x10] sm:$0xff]
        %v635 = vld [vmem:[#allocation2 + $0x18] sm:$0xff]
        %v636 = vpack.c.bf16 %v633, %v632
        %v637 = vpack.c.bf16 %v635, %v634
        %v638 = vld [vmem:[%s3] sm:$0xf]
        %v639 = vld [vmem:[%s3 + $0x4] sm:$0xf]
        %v640 = vld [vmem:[%s3 + $0x8] sm:$0xf]
        %v641 = vld [vmem:[%s3 + $0xc] sm:$0xf]
        %v646 = vunpack.c.l.b16 %v638
        %v647 = vunpack.c.l.b16 %v639
        %v648 = vunpack.c.l.b16 %v640
        %v649 = vunpack.c.l.b16 %v641
        %v650 = vpack.c.b16 %v647, %v646
        %v651 = vpack.c.b16 %v649, %v648
        %vm652 = vcmask 261120
        %v654 = vsel %vm652, %v650, 0
        %v657 = vsel %vm652, %v651, 0
        %659 = vmatprep.subr.bf16.mxu0 0
        %660 = vmatpush1.bf16.msra.mxu0 %v636
        %661 = vmatprep.subr.bf16.mxu0 0
        %662 = vmatpush1.bf16.msra.mxu0 %v637
        %663 = vmatprep.subr.bf16.mxu0 0
        %664 = vmatpush1.bf16.msra.mxu0 0
        %665 = vmatprep.subr.bf16.mxu0 0
        %666 = vmatpush1.bf16.msra.mxu0 0
        %667 = vmatprep.subr.bf16.mxu0 0
        %668 = vmatpush1.bf16.msra.mxu0 0
        %669 = vmatprep.subr.bf16.mxu0 0
        %670 = vmatpush1.bf16.msra.mxu0 0
        %671 = vmatprep.subr.bf16.mxu0 0
        %672 = vmatpush1.bf16.msra.mxu0 0
        %673 = vmatprep.subr.bf16.mxu0 0
        %674 = vmatpush1.bf16.msra.mxu0 0
        %675 = vmatprep.subr.bf16.mxu0 0
        %676 = vmatpush1.bf16.msra.mxu0 0
        %677 = vmatprep.subr.bf16.mxu0 0
        %678 = vmatpush1.bf16.msra.mxu0 0
        %679 = vmatprep.subr.bf16.mxu0 0
        %680 = vmatpush1.bf16.msra.mxu0 0
        %681 = vmatprep.subr.bf16.mxu0 0
        %682 = vmatpush1.bf16.msra.mxu0 0
        %683 = vmatprep.subr.bf16.mxu0 0
        %684 = vmatpush1.bf16.msra.mxu0 0
        %685 = vmatprep.subr.bf16.mxu0 0
        %686 = vmatpush1.bf16.msra.mxu0 0
        %687 = vmatprep.subr.bf16.mxu0 0
        %688 = vmatpush1.bf16.msra.mxu0 0
        %689 = vmatprep.subr.bf16.mxu0 0
        %690 = vmatpush1.bf16.msra.mxu0 0
        %691 = vmatprep.mubr.bf16.mxu0 0
        %692 = vmatmul.mubr.bf16.gmra.mrb[0].mxu0 %v654
        %v693 = vpop.f32.mrb[0].mxu0
        %v694 = vadd.f32 0.0, %v693
        %v695 = vpop.f32.mrb[0].mxu0
        %v696 = vpop.f32.mrb[0].mxu0
        %v697 = vadd.f32 0.0, %v696
        %v698 = vpop.f32.mrb[0].mxu0
        %699 = vmatprep.mubr.bf16.mxu0 0
        %700 = vmatmul.mubr.bf16.gmra.mrb[0].mxu0 %v657
        %v701 = vpop.f32.mrb[0].mxu0
        %v702 = vadd.f32 0.0, %v701
        %v703 = vpop.f32.mrb[0].mxu0
        %v704 = vpop.f32.mrb[0].mxu0
        %v705 = vadd.f32 0.0, %v704
        %v706 = vpop.f32.mrb[0].mxu0
        %707 = vdwg.mxu0
        %v710 = vcombine.high %v694, %v694
        %v712 = vunpack.c.l.s4 1983009808
        %v713 = vunpack.c.0.s8 %v712
        %v714 = vlaneseq
        %v715 = vshrl.u32 %v714, 7
        %v716 = vsub.s32 %v713, %v715
        %v717 = vrot.slane %v694, %v716
        %v719 = vunpack.c.l.s4 1983009808
        %v720 = vunpack.c.0.s8 %v719
        %v721 = vlaneseq
        %v722 = vshrl.u32 %v721, 7
        %v723 = vsub.s32 %v720, %v722
        %v724 = vrot.slane %v710, %v723
        %v725 = vcombine.high %v717, %v717
        %v726 = vcombine.high %v724, %v724
        %v727 = vcombine.high %v697, %v697
        %v729 = vunpack.c.l.s4 1983009808
        %v730 = vunpack.c.0.s8 %v729
        %v731 = vlaneseq
        %v732 = vshrl.u32 %v731, 7
        %v733 = vsub.s32 %v730, %v732
        %v734 = vrot.slane %v697, %v733
        %v736 = vunpack.c.l.s4 1983009808
        %v737 = vunpack.c.0.s8 %v736
        %v738 = vlaneseq
        %v739 = vshrl.u32 %v738, 7
        %v740 = vsub.s32 %v737, %v739
        %v741 = vrot.slane %v727, %v740
        %v742 = vcombine.high %v734, %v734
        %v743 = vcombine.high %v741, %v741
        %v752 = vpack.c.bf16 %v717, %v717
        %v753 = vpack.c.bf16 %v725, %v725
        %v754 = vpack.c.bf16 %v724, %v724
        %v755 = vpack.c.bf16 %v726, %v726
        %v756 = vpack.c.bf16 %v734, %v734
        %v757 = vpack.c.bf16 %v742, %v742
        %v758 = vpack.c.bf16 %v741, %v741
        %v759 = vpack.c.bf16 %v743, %v743
        %v762 = vcombine.high %v702, %v702
        %v764 = vunpack.c.l.s4 1983009808
        %v765 = vunpack.c.0.s8 %v764
        %v766 = vlaneseq
        %v767 = vshrl.u32 %v766, 7
        %v768 = vsub.s32 %v765, %v767
        %v769 = vrot.slane %v702, %v768
        %v771 = vunpack.c.l.s4 1983009808
        %v772 = vunpack.c.0.s8 %v771
        %v773 = vlaneseq
        %v774 = vshrl.u32 %v773, 7
        %v775 = vsub.s32 %v772, %v774
        %v776 = vrot.slane %v762, %v775
        %v777 = vcombine.high %v769, %v769
        %v778 = vcombine.high %v776, %v776
        %v779 = vcombine.high %v705, %v705
        %v781 = vunpack.c.l.s4 1983009808
        %v782 = vunpack.c.0.s8 %v781
        %v783 = vlaneseq
        %v784 = vshrl.u32 %v783, 7
        %v785 = vsub.s32 %v782, %v784
        %v786 = vrot.slane %v705, %v785
        %v788 = vunpack.c.l.s4 1983009808
        %v789 = vunpack.c.0.s8 %v788
        %v790 = vlaneseq
        %v791 = vshrl.u32 %v790, 7
        %v792 = vsub.s32 %v789, %v791
        %v793 = vrot.slane %v779, %v792
        %v794 = vcombine.high %v786, %v786
        %v795 = vcombine.high %v793, %v793
        %v804 = vpack.c.bf16 %v769, %v769
        %v805 = vpack.c.bf16 %v777, %v777
        %v806 = vpack.c.bf16 %v776, %v776
        %v807 = vpack.c.bf16 %v778, %v778
        %v808 = vpack.c.bf16 %v786, %v786
        %v809 = vpack.c.bf16 %v794, %v794
        %v810 = vpack.c.bf16 %v793, %v793
        %v811 = vpack.c.bf16 %v795, %v795
        %v812 = vld [vmem:[%s479] sm:$0xf]
        %v813 = vld [vmem:[%s479 + $0x4] sm:$0xf]
        %v814 = vld [vmem:[%s479 + $0x8] sm:$0xf]
        %v815 = vld [vmem:[%s479 + $0xc] sm:$0xf]
        %v816 = vld [vmem:[%s479 + $0x10] sm:$0xf]
        %v817 = vld [vmem:[%s479 + $0x14] sm:$0xf]
        %v818 = vld [vmem:[%s479 + $0x18] sm:$0xf]
        %v819 = vld [vmem:[%s479 + $0x1c] sm:$0xf]
        %v820 = vld [vmem:[%s479 + $0x20] sm:$0xf]
        %v821 = vld [vmem:[%s479 + $0x24] sm:$0xf]
        %v822 = vld [vmem:[%s479 + $0x28] sm:$0xf]
        %v823 = vld [vmem:[%s479 + $0x2c] sm:$0xf]
        %v824 = vld [vmem:[%s479 + $0x30] sm:$0xf]
        %v825 = vld [vmem:[%s479 + $0x34] sm:$0xf]
        %v826 = vld [vmem:[%s479 + $0x38] sm:$0xf]
        %v827 = vld [vmem:[%s479 + $0x3c] sm:$0xf]
        %v828 = vld [vmem:[%s479 + $0x40] sm:$0xf]
        %v829 = vld [vmem:[%s479 + $0x44] sm:$0xf]
        %v830 = vld [vmem:[%s479 + $0x48] sm:$0xf]
        %v831 = vld [vmem:[%s479 + $0x4c] sm:$0xf]
        %v832 = vld [vmem:[%s479 + $0x50] sm:$0xf]
        %v833 = vld [vmem:[%s479 + $0x54] sm:$0xf]
        %v834 = vld [vmem:[%s479 + $0x58] sm:$0xf]
        %v835 = vld [vmem:[%s479 + $0x5c] sm:$0xf]
        %v836 = vld [vmem:[%s479 + $0x60] sm:$0xf]
        %v837 = vld [vmem:[%s479 + $0x64] sm:$0xf]
        %v838 = vld [vmem:[%s479 + $0x68] sm:$0xf]
        %v839 = vld [vmem:[%s479 + $0x6c] sm:$0xf]
        %v840 = vld [vmem:[%s479 + $0x70] sm:$0xf]
        %v841 = vld [vmem:[%s479 + $0x74] sm:$0xf]
        %v842 = vld [vmem:[%s479 + $0x78] sm:$0xf]
        %v843 = vld [vmem:[%s479 + $0x7c] sm:$0xf]
        %v844 = vld [vmem:[%s479 + $0x80] sm:$0xf]
        %v845 = vld [vmem:[%s479 + $0x84] sm:$0xf]
        %v846 = vld [vmem:[%s479 + $0x88] sm:$0xf]
        %v847 = vld [vmem:[%s479 + $0x8c] sm:$0xf]
        %v848 = vld [vmem:[%s479 + $0x90] sm:$0xf]
        %v849 = vld [vmem:[%s479 + $0x94] sm:$0xf]
        %v850 = vld [vmem:[%s479 + $0x98] sm:$0xf]
        %v851 = vld [vmem:[%s479 + $0x9c] sm:$0xf]
        %v852 = vld [vmem:[%s479 + $0xa0] sm:$0xf]
        %v853 = vld [vmem:[%s479 + $0xa4] sm:$0xf]
        %v854 = vld [vmem:[%s479 + $0xa8] sm:$0xf]
        %v855 = vld [vmem:[%s479 + $0xac] sm:$0xf]
        %v856 = vld [vmem:[%s479 + $0xb0] sm:$0xf]
        %v857 = vld [vmem:[%s479 + $0xb4] sm:$0xf]
        %v858 = vld [vmem:[%s479 + $0xb8] sm:$0xf]
        %v859 = vld [vmem:[%s479 + $0xbc] sm:$0xf]
        %v860 = vld [vmem:[%s479 + $0xc0] sm:$0xf]
        %v861 = vld [vmem:[%s479 + $0xc4] sm:$0xf]
        %v862 = vld [vmem:[%s479 + $0xc8] sm:$0xf]
        %v863 = vld [vmem:[%s479 + $0xcc] sm:$0xf]
        %v864 = vld [vmem:[%s479 + $0xd0] sm:$0xf]
        %v865 = vld [vmem:[%s479 + $0xd4] sm:$0xf]
        %v866 = vld [vmem:[%s479 + $0xd8] sm:$0xf]
        %v867 = vld [vmem:[%s479 + $0xdc] sm:$0xf]
        %v868 = vld [vmem:[%s479 + $0xe0] sm:$0xf]
        %v869 = vld [vmem:[%s479 + $0xe4] sm:$0xf]
        %v870 = vld [vmem:[%s479 + $0xe8] sm:$0xf]
        %v871 = vld [vmem:[%s479 + $0xec] sm:$0xf]
        %v872 = vld [vmem:[%s479 + $0xf0] sm:$0xf]
        %v873 = vld [vmem:[%s479 + $0xf4] sm:$0xf]
        %v874 = vld [vmem:[%s479 + $0xf8] sm:$0xf]
        %v875 = vld [vmem:[%s479 + $0xfc] sm:$0xf]
        %v876 = vld [vmem:[%s488] sm:$0xf]
        %v877 = vld [vmem:[%s488 + $0x4] sm:$0xf]
        %v878 = vld [vmem:[%s488 + $0x8] sm:$0xf]
        %v879 = vld [vmem:[%s488 + $0xc] sm:$0xf]
        %v880 = vld [vmem:[%s488 + $0x10] sm:$0xf]
        %v881 = vld [vmem:[%s488 + $0x14] sm:$0xf]
        %v882 = vld [vmem:[%s488 + $0x18] sm:$0xf]
        %v883 = vld [vmem:[%s488 + $0x1c] sm:$0xf]
        %v884 = vld [vmem:[%s488 + $0x20] sm:$0xf]
        %v885 = vld [vmem:[%s488 + $0x24] sm:$0xf]
        %v886 = vld [vmem:[%s488 + $0x28] sm:$0xf]
        %v887 = vld [vmem:[%s488 + $0x2c] sm:$0xf]
        %v888 = vld [vmem:[%s488 + $0x30] sm:$0xf]
        %v889 = vld [vmem:[%s488 + $0x34] sm:$0xf]
        %v890 = vld [vmem:[%s488 + $0x38] sm:$0xf]
        %v891 = vld [vmem:[%s488 + $0x3c] sm:$0xf]
        %v892 = vld [vmem:[%s488 + $0x40] sm:$0xf]
        %v893 = vld [vmem:[%s488 + $0x44] sm:$0xf]
        %v894 = vld [vmem:[%s488 + $0x48] sm:$0xf]
        %v895 = vld [vmem:[%s488 + $0x4c] sm:$0xf]
        %v896 = vld [vmem:[%s488 + $0x50] sm:$0xf]
        %v897 = vld [vmem:[%s488 + $0x54] sm:$0xf]
        %v898 = vld [vmem:[%s488 + $0x58] sm:$0xf]
        %v899 = vld [vmem:[%s488 + $0x5c] sm:$0xf]
        %v900 = vld [vmem:[%s488 + $0x60] sm:$0xf]
        %v901 = vld [vmem:[%s488 + $0x64] sm:$0xf]
        %v902 = vld [vmem:[%s488 + $0x68] sm:$0xf]
        %v903 = vld [vmem:[%s488 + $0x6c] sm:$0xf]
        %v904 = vld [vmem:[%s488 + $0x70] sm:$0xf]
        %v905 = vld [vmem:[%s488 + $0x74] sm:$0xf]
        %v906 = vld [vmem:[%s488 + $0x78] sm:$0xf]
        %v907 = vld [vmem:[%s488 + $0x7c] sm:$0xf]
        %v908 = vld [vmem:[%s488 + $0x80] sm:$0xf]
        %v909 = vld [vmem:[%s488 + $0x84] sm:$0xf]
        %v910 = vld [vmem:[%s488 + $0x88] sm:$0xf]
        %v911 = vld [vmem:[%s488 + $0x8c] sm:$0xf]
        %v912 = vld [vmem:[%s488 + $0x90] sm:$0xf]
        %v913 = vld [vmem:[%s488 + $0x94] sm:$0xf]
        %v914 = vld [vmem:[%s488 + $0x98] sm:$0xf]
        %v915 = vld [vmem:[%s488 + $0x9c] sm:$0xf]
        %v916 = vld [vmem:[%s488 + $0xa0] sm:$0xf]
        %v917 = vld [vmem:[%s488 + $0xa4] sm:$0xf]
        %v918 = vld [vmem:[%s488 + $0xa8] sm:$0xf]
        %v919 = vld [vmem:[%s488 + $0xac] sm:$0xf]
        %v920 = vld [vmem:[%s488 + $0xb0] sm:$0xf]
        %v921 = vld [vmem:[%s488 + $0xb4] sm:$0xf]
        %v922 = vld [vmem:[%s488 + $0xb8] sm:$0xf]
        %v923 = vld [vmem:[%s488 + $0xbc] sm:$0xf]
        %v924 = vld [vmem:[%s488 + $0xc0] sm:$0xf]
        %v925 = vld [vmem:[%s488 + $0xc4] sm:$0xf]
        %v926 = vld [vmem:[%s488 + $0xc8] sm:$0xf]
        %v927 = vld [vmem:[%s488 + $0xcc] sm:$0xf]
        %v928 = vld [vmem:[%s488 + $0xd0] sm:$0xf]
        %v929 = vld [vmem:[%s488 + $0xd4] sm:$0xf]
        %v930 = vld [vmem:[%s488 + $0xd8] sm:$0xf]
        %v931 = vld [vmem:[%s488 + $0xdc] sm:$0xf]
        %v932 = vld [vmem:[%s488 + $0xe0] sm:$0xf]
        %v933 = vld [vmem:[%s488 + $0xe4] sm:$0xf]
        %v934 = vld [vmem:[%s488 + $0xe8] sm:$0xf]
        %v935 = vld [vmem:[%s488 + $0xec] sm:$0xf]
        %v936 = vld [vmem:[%s488 + $0xf0] sm:$0xf]
        %v937 = vld [vmem:[%s488 + $0xf4] sm:$0xf]
        %v938 = vld [vmem:[%s488 + $0xf8] sm:$0xf]
        %v939 = vld [vmem:[%s488 + $0xfc] sm:$0xf]
        %v948 = vunpack.c.l.b16 %v876
        %v949 = vunpack.c.l.b16 %v877
        %v950 = vunpack.c.l.b16 %v878
        %v951 = vunpack.c.l.b16 %v879
        %v952 = vunpack.c.l.b16 %v880
        %v953 = vunpack.c.l.b16 %v881
        %v954 = vunpack.c.l.b16 %v882
        %v955 = vunpack.c.l.b16 %v883
        %v956 = vpack.c.b16 %v949, %v948
        %v957 = vpack.c.b16 %v951, %v950
        %v958 = vpack.c.b16 %v953, %v952
        %v959 = vpack.c.b16 %v955, %v954
        %vm964 = vcmask 523264
        %v966 = vsel %vm964, %v804, 0
        %968 = vmatprep.subr.bf16.mxu0 0
        %969 = vmatpush1.bf16.msra.mxu0 %v956
        %970 = vmatprep.subr.bf16.mxu0 0
        %971 = vmatpush1.bf16.msra.mxu0 %v957
        %972 = vmatprep.subr.bf16.mxu0 0
        %973 = vmatpush1.bf16.msra.mxu0 %v958
        %974 = vmatprep.subr.bf16.mxu0 0
        %975 = vmatpush1.bf16.msra.mxu0 %v959
        %976 = vmatprep.subr.bf16.mxu0 0
        %977 = vmatpush1.bf16.msra.mxu0 0
        %978 = vmatprep.subr.bf16.mxu0 0
        %979 = vmatpush1.bf16.msra.mxu0 0
        %980 = vmatprep.subr.bf16.mxu0 0
        %981 = vmatpush1.bf16.msra.mxu0 0
        %982 = vmatprep.subr.bf16.mxu0 0
        %983 = vmatpush1.bf16.msra.mxu0 0
        %984 = vmatprep.subr.bf16.mxu0 0
        %985 = vmatpush1.bf16.msra.mxu0 0
        %986 = vmatprep.subr.bf16.mxu0 0
        %987 = vmatpush1.bf16.msra.mxu0 0
        %988 = vmatprep.subr.bf16.mxu0 0
        %989 = vmatpush1.bf16.msra.mxu0 0
        %990 = vmatprep.subr.bf16.mxu0 0
        %991 = vmatpush1.bf16.msra.mxu0 0
        %992 = vmatprep.subr.bf16.mxu0 0
        %993 = vmatpush1.bf16.msra.mxu0 0
        %994 = vmatprep.subr.bf16.mxu0 0
        %995 = vmatpush1.bf16.msra.mxu0 0
        %996 = vmatprep.subr.bf16.mxu0 0
        %997 = vmatpush1.bf16.msra.mxu0 0
        %998 = vmatprep.subr.bf16.mxu0 0
        %999 = vmatpush1.bf16.msra.mxu0 0
        %1000 = vmatprep.mubr.bf16.mxu0 0
        %1001 = vmatmul.mubr.bf16.gmra.mrb[0].mxu0 %v966
        %v1002 = vpop.f32.mrb[0].mxu0
        %v1003 = vadd.f32 0.0, %v1002
        %v1004 = vpop.f32.mrb[0].mxu0
        %v1005 = vpop.f32.mrb[0].mxu0
        %v1006 = vpop.f32.mrb[0].mxu0
        %1007 = vdwg.mxu0
        %v1016 = vunpack.c.l.b16 %v884
        %v1017 = vunpack.c.l.b16 %v885
        %v1018 = vunpack.c.l.b16 %v886
        %v1019 = vunpack.c.l.b16 %v887
        %v1020 = vunpack.c.l.b16 %v888
        %v1021 = vunpack.c.l.b16 %v889
        %v1022 = vunpack.c.l.b16 %v890
        %v1023 = vunpack.c.l.b16 %v891
        %v1024 = vpack.c.b16 %v1017, %v1016
        %v1025 = vpack.c.b16 %v1019, %v1018
        %v1026 = vpack.c.b16 %v1021, %v1020
        %v1027 = vpack.c.b16 %v1023, %v1022
        %v1033 = vsel %vm964, %v805, 0
        %1035 = vmatprep.subr.bf16.mxu0 0
        %1036 = vmatpush1.bf16.msra.mxu0 %v1024
        %1037 = vmatprep.subr.bf16.mxu0 0
        %1038 = vmatpush1.bf16.msra.mxu0 %v1025
        %1039 = vmatprep.subr.bf16.mxu0 0
        %1040 = vmatpush1.bf16.msra.mxu0 %v1026
        %1041 = vmatprep.subr.bf16.mxu0 0
        %1042 = vmatpush1.bf16.msra.mxu0 %v1027
        %1043 = vmatprep.subr.bf16.mxu0 0
        %1044 = vmatpush1.bf16.msra.mxu0 0
        %1045 = vmatprep.subr.bf16.mxu0 0
        %1046 = vmatpush1.bf16.msra.mxu0 0
        %1047 = vmatprep.subr.bf16.mxu0 0
        %1048 = vmatpush1.bf16.msra.mxu0 0
        %1049 = vmatprep.subr.bf16.mxu0 0
        %1050 = vmatpush1.bf16.msra.mxu0 0
        %1051 = vmatprep.subr.bf16.mxu0 0
        %1052 = vmatpush1.bf16.msra.mxu0 0
        %1053 = vmatprep.subr.bf16.mxu0 0
        %1054 = vmatpush1.bf16.msra.mxu0 0
        %1055 = vmatprep.subr.bf16.mxu0 0
        %1056 = vmatpush1.bf16.msra.mxu0 0
        %1057 = vmatprep.subr.bf16.mxu0 0
        %1058 = vmatpush1.bf16.msra.mxu0 0
        %1059 = vmatprep.subr.bf16.mxu0 0
        %1060 = vmatpush1.bf16.msra.mxu0 0
        %1061 = vmatprep.subr.bf16.mxu0 0
        %1062 = vmatpush1.bf16.msra.mxu0 0
        %1063 = vmatprep.subr.bf16.mxu0 0
        %1064 = vmatpush1.bf16.msra.mxu0 0
        %1065 = vmatprep.subr.bf16.mxu0 0
        %1066 = vmatpush1.bf16.msra.mxu0 0
        %1067 = vmatprep.mubr.bf16.mxu0 0
        %1068 = vmatmul.mubr.bf16.gmra.mrb[0].mxu0 %v1033
        %v1069 = vpop.f32.mrb[0].mxu0
        %v1070 = vadd.f32 0.0, %v1069
        %v1071 = vpop.f32.mrb[0].mxu0
        %v1072 = vpop.f32.mrb[0].mxu0
        %v1073 = vpop.f32.mrb[0].mxu0
        %1074 = vdwg.mxu0
        %v1083 = vunpack.c.l.b16 %v892
        %v1084 = vunpack.c.l.b16 %v893
        %v1085 = vunpack.c.l.b16 %v894
        %v1086 = vunpack.c.l.b16 %v895
        %v1087 = vunpack.c.l.b16 %v896
        %v1088 = vunpack.c.l.b16 %v897
        %v1089 = vunpack.c.l.b16 %v898
        %v1090 = vunpack.c.l.b16 %v899
        %v1091 = vpack.c.b16 %v1084, %v1083
        %v1092 = vpack.c.b16 %v1086, %v1085
        %v1093 = vpack.c.b16 %v1088, %v1087
        %v1094 = vpack.c.b16 %v1090, %v1089
        %v1100 = vsel %vm964, %v806, 0
        %1102 = vmatprep.subr.bf16.mxu0 0
        %1103 = vmatpush1.bf16.msra.mxu0 %v1091
        %1104 = vmatprep.subr.bf16.mxu0 0
        %1105 = vmatpush1.bf16.msra.mxu0 %v1092
        %1106 = vmatprep.subr.bf16.mxu0 0
        %1107 = vmatpush1.bf16.msra.mxu0 %v1093
        %1108 = vmatprep.subr.bf16.mxu0 0
        %1109 = vmatpush1.bf16.msra.mxu0 %v1094
        %1110 = vmatprep.subr.bf16.mxu0 0
        %1111 = vmatpush1.bf16.msra.mxu0 0
        %1112 = vmatprep.subr.bf16.mxu0 0
        %1113 = vmatpush1.bf16.msra.mxu0 0
        %1114 = vmatprep.subr.bf16.mxu0 0
        %1115 = vmatpush1.bf16.msra.mxu0 0
        %1116 = vmatprep.subr.bf16.mxu0 0
        %1117 = vmatpush1.bf16.msra.mxu0 0
        %1118 = vmatprep.subr.bf16.mxu0 0
        %1119 = vmatpush1.bf16.msra.mxu0 0
        %1120 = vmatprep.subr.bf16.mxu0 0
        %1121 = vmatpush1.bf16.msra.mxu0 0
        %1122 = vmatprep.subr.bf16.mxu0 0
        %1123 = vmatpush1.bf16.msra.mxu0 0
        %1124 = vmatprep.subr.bf16.mxu0 0
        %1125 = vmatpush1.bf16.msra.mxu0 0
        %1126 = vmatprep.subr.bf16.mxu0 0
        %1127 = vmatpush1.bf16.msra.mxu0 0
        %1128 = vmatprep.subr.bf16.mxu0 0
        %1129 = vmatpush1.bf16.msra.mxu0 0
        %1130 = vmatprep.subr.bf16.mxu0 0
        %1131 = vmatpush1.bf16.msra.mxu0 0
        %1132 = vmatprep.subr.bf16.mxu0 0
        %1133 = vmatpush1.bf16.msra.mxu0 0
        %1134 = vmatprep.mubr.bf16.mxu0 0
        %1135 = vmatmul.mubr.bf16.gmra.mrb[0].mxu0 %v1100
        %v1136 = vpop.f32.mrb[0].mxu0
        %v1137 = vadd.f32 0.0, %v1136
        %v1138 = vpop.f32.mrb[0].mxu0
        %v1139 = vpop.f32.mrb[0].mxu0
        %v1140 = vpop.f32.mrb[0].mxu0
        %1141 = vdwg.mxu0
        %v1150 = vunpack.c.l.b16 %v900
        %v1151 = vunpack.c.l.b16 %v901
        %v1152 = vunpack.c.l.b16 %v902
        %v1153 = vunpack.c.l.b16 %v903
        %v1154 = vunpack.c.l.b16 %v904
        %v1155 = vunpack.c.l.b16 %v905
        %v1156 = vunpack.c.l.b16 %v906
        %v1157 = vunpack.c.l.b16 %v907
        %v1158 = vpack.c.b16 %v1151, %v1150
        %v1159 = vpack.c.b16 %v1153, %v1152
        %v1160 = vpack.c.b16 %v1155, %v1154
        %v1161 = vpack.c.b16 %v1157, %v1156
        %v1167 = vsel %vm964, %v807, 0
        %1169 = vmatprep.subr.bf16.mxu0 0
        %1170 = vmatpush1.bf16.msra.mxu0 %v1158
        %1171 = vmatprep.subr.bf16.mxu0 0
        %1172 = vmatpush1.bf16.msra.mxu0 %v1159
        %1173 = vmatprep.subr.bf16.mxu0 0
        %1174 = vmatpush1.bf16.msra.mxu0 %v1160
        %1175 = vmatprep.subr.bf16.mxu0 0
        %1176 = vmatpush1.bf16.msra.mxu0 %v1161
        %1177 = vmatprep.subr.bf16.mxu0 0
        %1178 = vmatpush1.bf16.msra.mxu0 0
        %1179 = vmatprep.subr.bf16.mxu0 0
        %1180 = vmatpush1.bf16.msra.mxu0 0
        %1181 = vmatprep.subr.bf16.mxu0 0
        %1182 = vmatpush1.bf16.msra.mxu0 0
        %1183 = vmatprep.subr.bf16.mxu0 0
        %1184 = vmatpush1.bf16.msra.mxu0 0
        %1185 = vmatprep.subr.bf16.mxu0 0
        %1186 = vmatpush1.bf16.msra.mxu0 0
        %1187 = vmatprep.subr.bf16.mxu0 0
        %1188 = vmatpush1.bf16.msra.mxu0 0
        %1189 = vmatprep.subr.bf16.mxu0 0
        %1190 = vmatpush1.bf16.msra.mxu0 0
        %1191 = vmatprep.subr.bf16.mxu0 0
        %1192 = vmatpush1.bf16.msra.mxu0 0
        %1193 = vmatprep.subr.bf16.mxu0 0
        %1194 = vmatpush1.bf16.msra.mxu0 0
        %1195 = vmatprep.subr.bf16.mxu0 0
        %1196 = vmatpush1.bf16.msra.mxu0 0
        %1197 = vmatprep.subr.bf16.mxu0 0
        %1198 = vmatpush1.bf16.msra.mxu0 0
        %1199 = vmatprep.subr.bf16.mxu0 0
        %1200 = vmatpush1.bf16.msra.mxu0 0
        %1201 = vmatprep.mubr.bf16.mxu0 0
        %1202 = vmatmul.mubr.bf16.gmra.mrb[0].mxu0 %v1167
        %v1203 = vpop.f32.mrb[0].mxu0
        %v1204 = vadd.f32 0.0, %v1203
        %v1205 = vpop.f32.mrb[0].mxu0
        %v1206 = vpop.f32.mrb[0].mxu0
        %v1207 = vpop.f32.mrb[0].mxu0
        %1208 = vdwg.mxu0
        %v1217 = vunpack.c.l.b16 %v908
        %v1218 = vunpack.c.l.b16 %v909
        %v1219 = vunpack.c.l.b16 %v910
        %v1220 = vunpack.c.l.b16 %v911
        %v1221 = vunpack.c.l.b16 %v912
        %v1222 = vunpack.c.l.b16 %v913
        %v1223 = vunpack.c.l.b16 %v914
        %v1224 = vunpack.c.l.b16 %v915
        %v1225 = vpack.c.b16 %v1218, %v1217
        %v1226 = vpack.c.b16 %v1220, %v1219
        %v1227 = vpack.c.b16 %v1222, %v1221
        %v1228 = vpack.c.b16 %v1224, %v1223
        %v1234 = vsel %vm964, %v808, 0
        %1236 = vmatprep.subr.bf16.mxu0 0
        %1237 = vmatpush1.bf16.msra.mxu0 %v1225
        %1238 = vmatprep.subr.bf16.mxu0 0
        %1239 = vmatpush1.bf16.msra.mxu0 %v1226
        %1240 = vmatprep.subr.bf16.mxu0 0
        %1241 = vmatpush1.bf16.msra.mxu0 %v1227
        %1242 = vmatprep.subr.bf16.mxu0 0
        %1243 = vmatpush1.bf16.msra.mxu0 %v1228
        %1244 = vmatprep.subr.bf16.mxu0 0
        %1245 = vmatpush1.bf16.msra.mxu0 0
        %1246 = vmatprep.subr.bf16.mxu0 0
        %1247 = vmatpush1.bf16.msra.mxu0 0
        %1248 = vmatprep.subr.bf16.mxu0 0
        %1249 = vmatpush1.bf16.msra.mxu0 0
        %1250 = vmatprep.subr.bf16.mxu0 0
        %1251 = vmatpush1.bf16.msra.mxu0 0
        %1252 = vmatprep.subr.bf16.mxu0 0
        %1253 = vmatpush1.bf16.msra.mxu0 0
        %1254 = vmatprep.subr.bf16.mxu0 0
        %1255 = vmatpush1.bf16.msra.mxu0 0
        %1256 = vmatprep.subr.bf16.mxu0 0
        %1257 = vmatpush1.bf16.msra.mxu0 0
        %1258 = vmatprep.subr.bf16.mxu0 0
        %1259 = vmatpush1.bf16.msra.mxu0 0
        %1260 = vmatprep.subr.bf16.mxu0 0
        %1261 = vmatpush1.bf16.msra.mxu0 0
        %1262 = vmatprep.subr.bf16.mxu0 0
        %1263 = vmatpush1.bf16.msra.mxu0 0
        %1264 = vmatprep.subr.bf16.mxu0 0
        %1265 = vmatpush1.bf16.msra.mxu0 0
        %1266 = vmatprep.subr.bf16.mxu0 0
        %1267 = vmatpush1.bf16.msra.mxu0 0
        %1268 = vmatprep.mubr.bf16.mxu0 0
        %1269 = vmatmul.mubr.bf16.gmra.mrb[0].mxu0 %v1234
        %v1270 = vpop.f32.mrb[0].mxu0
        %v1271 = vadd.f32 0.0, %v1270
        %v1272 = vpop.f32.mrb[0].mxu0
        %v1273 = vpop.f32.mrb[0].mxu0
        %v1274 = vpop.f32.mrb[0].mxu0
        %1275 = vdwg.mxu0
        %v1284 = vunpack.c.l.b16 %v916
        %v1285 = vunpack.c.l.b16 %v917
        %v1286 = vunpack.c.l.b16 %v918
        %v1287 = vunpack.c.l.b16 %v919
        %v1288 = vunpack.c.l.b16 %v920
        %v1289 = vunpack.c.l.b16 %v921
        %v1290 = vunpack.c.l.b16 %v922
        %v1291 = vunpack.c.l.b16 %v923
        %v1292 = vpack.c.b16 %v1285, %v1284
        %v1293 = vpack.c.b16 %v1287, %v1286
        %v1294 = vpack.c.b16 %v1289, %v1288
        %v1295 = vpack.c.b16 %v1291, %v1290
        %v1301 = vsel %vm964, %v809, 0
        %1303 = vmatprep.subr.bf16.mxu0 0
        %1304 = vmatpush1.bf16.msra.mxu0 %v1292
        %1305 = vmatprep.subr.bf16.mxu0 0
        %1306 = vmatpush1.bf16.msra.mxu0 %v1293
        %1307 = vmatprep.subr.bf16.mxu0 0
        %1308 = vmatpush1.bf16.msra.mxu0 %v1294
        %1309 = vmatprep.subr.bf16.mxu0 0
        %1310 = vmatpush1.bf16.msra.mxu0 %v1295
        %1311 = vmatprep.subr.bf16.mxu0 0
        %1312 = vmatpush1.bf16.msra.mxu0 0
        %1313 = vmatprep.subr.bf16.mxu0 0
        %1314 = vmatpush1.bf16.msra.mxu0 0
        %1315 = vmatprep.subr.bf16.mxu0 0
        %1316 = vmatpush1.bf16.msra.mxu0 0
        %1317 = vmatprep.subr.bf16.mxu0 0
        %1318 = vmatpush1.bf16.msra.mxu0 0
        %1319 = vmatprep.subr.bf16.mxu0 0
        %1320 = vmatpush1.bf16.msra.mxu0 0
        %1321 = vmatprep.subr.bf16.mxu0 0
        %1322 = vmatpush1.bf16.msra.mxu0 0
        %1323 = vmatprep.subr.bf16.mxu0 0
        %1324 = vmatpush1.bf16.msra.mxu0 0
        %1325 = vmatprep.subr.bf16.mxu0 0
        %1326 = vmatpush1.bf16.msra.mxu0 0
        %1327 = vmatprep.subr.bf16.mxu0 0
        %1328 = vmatpush1.bf16.msra.mxu0 0
        %1329 = vmatprep.subr.bf16.mxu0 0
        %1330 = vmatpush1.bf16.msra.mxu0 0
        %1331 = vmatprep.subr.bf16.mxu0 0
        %1332 = vmatpush1.bf16.msra.mxu0 0
        %1333 = vmatprep.subr.bf16.mxu0 0
        %1334 = vmatpush1.bf16.msra.mxu0 0
        %1335 = vmatprep.mubr.bf16.mxu0 0
        %1336 = vmatmul.mubr.bf16.gmra.mrb[0].mxu0 %v1301
        %v1337 = vpop.f32.mrb[0].mxu0
        %v1338 = vadd.f32 0.0, %v1337
        %v1339 = vpop.f32.mrb[0].mxu0
        %v1340 = vpop.f32.mrb[0].mxu0
        %v1341 = vpop.f32.mrb[0].mxu0
        %1342 = vdwg.mxu0
        %v1351 = vunpack.c.l.b16 %v924
        %v1352 = vunpack.c.l.b16 %v925
        %v1353 = vunpack.c.l.b16 %v926
        %v1354 = vunpack.c.l.b16 %v927
        %v1355 = vunpack.c.l.b16 %v928
        %v1356 = vunpack.c.l.b16 %v929
        %v1357 = vunpack.c.l.b16 %v930
        %v1358 = vunpack.c.l.b16 %v931
        %v1359 = vpack.c.b16 %v1352, %v1351
        %v1360 = vpack.c.b16 %v1354, %v1353
        %v1361 = vpack.c.b16 %v1356, %v1355
        %v1362 = vpack.c.b16 %v1358, %v1357
        %v1368 = vsel %vm964, %v810, 0
        %1370 = vmatprep.subr.bf16.mxu0 0
        %1371 = vmatpush1.bf16.msra.mxu0 %v1359
        %1372 = vmatprep.subr.bf16.mxu0 0
        %1373 = vmatpush1.bf16.msra.mxu0 %v1360
        %1374 = vmatprep.subr.bf16.mxu0 0
        %1375 = vmatpush1.bf16.msra.mxu0 %v1361
        %1376 = vmatprep.subr.bf16.mxu0 0
        %1377 = vmatpush1.bf16.msra.mxu0 %v1362
        %1378 = vmatprep.subr.bf16.mxu0 0
        %1379 = vmatpush1.bf16.msra.mxu0 0
        %1380 = vmatprep.subr.bf16.mxu0 0
        %1381 = vmatpush1.bf16.msra.mxu0 0
        %1382 = vmatprep.subr.bf16.mxu0 0
        %1383 = vmatpush1.bf16.msra.mxu0 0
        %1384 = vmatprep.subr.bf16.mxu0 0
        %1385 = vmatpush1.bf16.msra.mxu0 0
        %1386 = vmatprep.subr.bf16.mxu0 0
        %1387 = vmatpush1.bf16.msra.mxu0 0
        %1388 = vmatprep.subr.bf16.mxu0 0
        %1389 = vmatpush1.bf16.msra.mxu0 0
        %1390 = vmatprep.subr.bf16.mxu0 0
        %1391 = vmatpush1.bf16.msra.mxu0 0
        %1392 = vmatprep.subr.bf16.mxu0 0
        %1393 = vmatpush1.bf16.msra.mxu0 0
        %1394 = vmatprep.subr.bf16.mxu0 0
        %1395 = vmatpush1.bf16.msra.mxu0 0
        %1396 = vmatprep.subr.bf16.mxu0 0
        %1397 = vmatpush1.bf16.msra.mxu0 0
        %1398 = vmatprep.subr.bf16.mxu0 0
        %1399 = vmatpush1.bf16.msra.mxu0 0
        %1400 = vmatprep.subr.bf16.mxu0 0
        %1401 = vmatpush1.bf16.msra.mxu0 0
        %1402 = vmatprep.mubr.bf16.mxu0 0
        %1403 = vmatmul.mubr.bf16.gmra.mrb[0].mxu0 %v1368
        %v1404 = vpop.f32.mrb[0].mxu0
        %v1405 = vadd.f32 0.0, %v1404
        %v1406 = vpop.f32.mrb[0].mxu0
        %v1407 = vpop.f32.mrb[0].mxu0
        %v1408 = vpop.f32.mrb[0].mxu0
        %1409 = vdwg.mxu0
        %v1418 = vunpack.c.l.b16 %v932
        %v1419 = vunpack.c.l.b16 %v933
        %v1420 = vunpack.c.l.b16 %v934
        %v1421 = vunpack.c.l.b16 %v935
        %v1422 = vunpack.c.l.b16 %v936
        %v1423 = vunpack.c.l.b16 %v937
        %v1424 = vunpack.c.l.b16 %v938
        %v1425 = vunpack.c.l.b16 %v939
        %v1426 = vpack.c.b16 %v1419, %v1418
        %v1427 = vpack.c.b16 %v1421, %v1420
        %v1428 = vpack.c.b16 %v1423, %v1422
        %v1429 = vpack.c.b16 %v1425, %v1424
        %v1435 = vsel %vm964, %v811, 0
        %1437 = vmatprep.subr.bf16.mxu0 0
        %1438 = vmatpush1.bf16.msra.mxu0 %v1426
        %1439 = vmatprep.subr.bf16.mxu0 0
        %1440 = vmatpush1.bf16.msra.mxu0 %v1427
        %1441 = vmatprep.subr.bf16.mxu0 0
        %1442 = vmatpush1.bf16.msra.mxu0 %v1428
        %1443 = vmatprep.subr.bf16.mxu0 0
        %1444 = vmatpush1.bf16.msra.mxu0 %v1429
        %1445 = vmatprep.subr.bf16.mxu0 0
        %1446 = vmatpush1.bf16.msra.mxu0 0
        %1447 = vmatprep.subr.bf16.mxu0 0
        %1448 = vmatpush1.bf16.msra.mxu0 0
        %1449 = vmatprep.subr.bf16.mxu0 0
        %1450 = vmatpush1.bf16.msra.mxu0 0
        %1451 = vmatprep.subr.bf16.mxu0 0
        %1452 = vmatpush1.bf16.msra.mxu0 0
        %1453 = vmatprep.subr.bf16.mxu0 0
        %1454 = vmatpush1.bf16.msra.mxu0 0
        %1455 = vmatprep.subr.bf16.mxu0 0
        %1456 = vmatpush1.bf16.msra.mxu0 0
        %1457 = vmatprep.subr.bf16.mxu0 0
        %1458 = vmatpush1.bf16.msra.mxu0 0
        %1459 = vmatprep.subr.bf16.mxu0 0
        %1460 = vmatpush1.bf16.msra.mxu0 0
        %1461 = vmatprep.subr.bf16.mxu0 0
        %1462 = vmatpush1.bf16.msra.mxu0 0
        %1463 = vmatprep.subr.bf16.mxu0 0
        %1464 = vmatpush1.bf16.msra.mxu0 0
        %1465 = vmatprep.subr.bf16.mxu0 0
        %1466 = vmatpush1.bf16.msra.mxu0 0
        %1467 = vmatprep.subr.bf16.mxu0 0
        %1468 = vmatpush1.bf16.msra.mxu0 0
        %1469 = vmatprep.mubr.bf16.mxu0 0
        %1470 = vmatmul.mubr.bf16.gmra.mrb[0].mxu0 %v1435
        %v1471 = vpop.f32.mrb[0].mxu0
        %v1472 = vadd.f32 0.0, %v1471
        %v1473 = vpop.f32.mrb[0].mxu0
        %v1474 = vpop.f32.mrb[0].mxu0
        %v1475 = vpop.f32.mrb[0].mxu0
        %1476 = vdwg.mxu0
        %v1485 = vunpack.c.l.b16 %v812
        %v1486 = vunpack.c.l.b16 %v813
        %v1487 = vunpack.c.l.b16 %v814
        %v1488 = vunpack.c.l.b16 %v815
        %v1489 = vunpack.c.l.b16 %v816
        %v1490 = vunpack.c.l.b16 %v817
        %v1491 = vunpack.c.l.b16 %v818
        %v1492 = vunpack.c.l.b16 %v819
        %v1493 = vpack.c.b16 %v1486, %v1485
        %v1494 = vpack.c.b16 %v1488, %v1487
        %v1495 = vpack.c.b16 %v1490, %v1489
        %v1496 = vpack.c.b16 %v1492, %v1491
        %v1502 = vsel %vm964, %v752, 0
        %1504 = vmatprep.subr.bf16.mxu0 0
        %1505 = vmatpush1.bf16.msra.mxu0 %v1493
        %1506 = vmatprep.subr.bf16.mxu0 0
        %1507 = vmatpush1.bf16.msra.mxu0 %v1494
        %1508 = vmatprep.subr.bf16.mxu0 0
        %1509 = vmatpush1.bf16.msra.mxu0 %v1495
        %1510 = vmatprep.subr.bf16.mxu0 0
        %1511 = vmatpush1.bf16.msra.mxu0 %v1496
        %1512 = vmatprep.subr.bf16.mxu0 0
        %1513 = vmatpush1.bf16.msra.mxu0 0
        %1514 = vmatprep.subr.bf16.mxu0 0
        %1515 = vmatpush1.bf16.msra.mxu0 0
        %1516 = vmatprep.subr.bf16.mxu0 0
        %1517 = vmatpush1.bf16.msra.mxu0 0
        %1518 = vmatprep.subr.bf16.mxu0 0
        %1519 = vmatpush1.bf16.msra.mxu0 0
        %1520 = vmatprep.subr.bf16.mxu0 0
        %1521 = vmatpush1.bf16.msra.mxu0 0
        %1522 = vmatprep.subr.bf16.mxu0 0
        %1523 = vmatpush1.bf16.msra.mxu0 0
        %1524 = vmatprep.subr.bf16.mxu0 0
        %1525 = vmatpush1.bf16.msra.mxu0 0
        %1526 = vmatprep.subr.bf16.mxu0 0
        %1527 = vmatpush1.bf16.msra.mxu0 0
        %1528 = vmatprep.subr.bf16.mxu0 0
        %1529 = vmatpush1.bf16.msra.mxu0 0
        %1530 = vmatprep.subr.bf16.mxu0 0
        %1531 = vmatpush1.bf16.msra.mxu0 0
        %1532 = vmatprep.subr.bf16.mxu0 0
        %1533 = vmatpush1.bf16.msra.mxu0 0
        %1534 = vmatprep.subr.bf16.mxu0 0
        %1535 = vmatpush1.bf16.msra.mxu0 0
        %1536 = vmatprep.mubr.bf16.mxu0 0
        %1537 = vmatmul.mubr.bf16.gmra.mrb[0].mxu0 %v1502
        %v1538 = vpop.f32.mrb[0].mxu0
        %v1539 = vadd.f32 %v1003, %v1538
        %v1540 = vpop.f32.mrb[0].mxu0
        %v1541 = vpop.f32.mrb[0].mxu0
        %v1542 = vpop.f32.mrb[0].mxu0
        %1543 = vdwg.mxu0
        %v1552 = vunpack.c.l.b16 %v820
        %v1553 = vunpack.c.l.b16 %v821
        %v1554 = vunpack.c.l.b16 %v822
        %v1555 = vunpack.c.l.b16 %v823
        %v1556 = vunpack.c.l.b16 %v824
        %v1557 = vunpack.c.l.b16 %v825
        %v1558 = vunpack.c.l.b16 %v826
        %v1559 = vunpack.c.l.b16 %v827
        %v1560 = vpack.c.b16 %v1553, %v1552
        %v1561 = vpack.c.b16 %v1555, %v1554
        %v1562 = vpack.c.b16 %v1557, %v1556
        %v1563 = vpack.c.b16 %v1559, %v1558
        %v1569 = vsel %vm964, %v753, 0
        %1571 = vmatprep.subr.bf16.mxu0 0
        %1572 = vmatpush1.bf16.msra.mxu0 %v1560
        %1573 = vmatprep.subr.bf16.mxu0 0
        %1574 = vmatpush1.bf16.msra.mxu0 %v1561
        %1575 = vmatprep.subr.bf16.mxu0 0
        %1576 = vmatpush1.bf16.msra.mxu0 %v1562
        %1577 = vmatprep.subr.bf16.mxu0 0
        %1578 = vmatpush1.bf16.msra.mxu0 %v1563
        %1579 = vmatprep.subr.bf16.mxu0 0
        %1580 = vmatpush1.bf16.msra.mxu0 0
        %1581 = vmatprep.subr.bf16.mxu0 0
        %1582 = vmatpush1.bf16.msra.mxu0 0
        %1583 = vmatprep.subr.bf16.mxu0 0
        %1584 = vmatpush1.bf16.msra.mxu0 0
        %1585 = vmatprep.subr.bf16.mxu0 0
        %1586 = vmatpush1.bf16.msra.mxu0 0
        %1587 = vmatprep.subr.bf16.mxu0 0
        %1588 = vmatpush1.bf16.msra.mxu0 0
        %1589 = vmatprep.subr.bf16.mxu0 0
        %1590 = vmatpush1.bf16.msra.mxu0 0
        %1591 = vmatprep.subr.bf16.mxu0 0
        %1592 = vmatpush1.bf16.msra.mxu0 0
        %1593 = vmatprep.subr.bf16.mxu0 0
        %1594 = vmatpush1.bf16.msra.mxu0 0
        %1595 = vmatprep.subr.bf16.mxu0 0
        %1596 = vmatpush1.bf16.msra.mxu0 0
        %1597 = vmatprep.subr.bf16.mxu0 0
        %1598 = vmatpush1.bf16.msra.mxu0 0
        %1599 = vmatprep.subr.bf16.mxu0 0
        %1600 = vmatpush1.bf16.msra.mxu0 0
        %1601 = vmatprep.subr.bf16.mxu0 0
        %1602 = vmatpush1.bf16.msra.mxu0 0
        %1603 = vmatprep.mubr.bf16.mxu0 0
        %1604 = vmatmul.mubr.bf16.gmra.mrb[0].mxu0 %v1569
        %v1605 = vpop.f32.mrb[0].mxu0
        %v1606 = vadd.f32 %v1070, %v1605
        %v1607 = vpop.f32.mrb[0].mxu0
        %v1608 = vpop.f32.mrb[0].mxu0
        %v1609 = vpop.f32.mrb[0].mxu0
        %1610 = vdwg.mxu0
        %v1619 = vunpack.c.l.b16 %v828
        %v1620 = vunpack.c.l.b16 %v829
        %v1621 = vunpack.c.l.b16 %v830
        %v1622 = vunpack.c.l.b16 %v831
        %v1623 = vunpack.c.l.b16 %v832
        %v1624 = vunpack.c.l.b16 %v833
        %v1625 = vunpack.c.l.b16 %v834
        %v1626 = vunpack.c.l.b16 %v835
        %v1627 = vpack.c.b16 %v1620, %v1619
        %v1628 = vpack.c.b16 %v1622, %v1621
        %v1629 = vpack.c.b16 %v1624, %v1623
        %v1630 = vpack.c.b16 %v1626, %v1625
        %v1636 = vsel %vm964, %v754, 0
        %1638 = vmatprep.subr.bf16.mxu0 0
        %1639 = vmatpush1.bf16.msra.mxu0 %v1627
        %1640 = vmatprep.subr.bf16.mxu0 0
        %1641 = vmatpush1.bf16.msra.mxu0 %v1628
        %1642 = vmatprep.subr.bf16.mxu0 0
        %1643 = vmatpush1.bf16.msra.mxu0 %v1629
        %1644 = vmatprep.subr.bf16.mxu0 0
        %1645 = vmatpush1.bf16.msra.mxu0 %v1630
        %1646 = vmatprep.subr.bf16.mxu0 0
        %1647 = vmatpush1.bf16.msra.mxu0 0
        %1648 = vmatprep.subr.bf16.mxu0 0
        %1649 = vmatpush1.bf16.msra.mxu0 0
        %1650 = vmatprep.subr.bf16.mxu0 0
        %1651 = vmatpush1.bf16.msra.mxu0 0
        %1652 = vmatprep.subr.bf16.mxu0 0
        %1653 = vmatpush1.bf16.msra.mxu0 0
        %1654 = vmatprep.subr.bf16.mxu0 0
        %1655 = vmatpush1.bf16.msra.mxu0 0
        %1656 = vmatprep.subr.bf16.mxu0 0
        %1657 = vmatpush1.bf16.msra.mxu0 0
        %1658 = vmatprep.subr.bf16.mxu0 0
        %1659 = vmatpush1.bf16.msra.mxu0 0
        %1660 = vmatprep.subr.bf16.mxu0 0
        %1661 = vmatpush1.bf16.msra.mxu0 0
        %1662 = vmatprep.subr.bf16.mxu0 0
        %1663 = vmatpush1.bf16.msra.mxu0 0
        %1664 = vmatprep.subr.bf16.mxu0 0
        %1665 = vmatpush1.bf16.msra.mxu0 0
        %1666 = vmatprep.subr.bf16.mxu0 0
        %1667 = vmatpush1.bf16.msra.mxu0 0
        %1668 = vmatprep.subr.bf16.mxu0 0
        %1669 = vmatpush1.bf16.msra.mxu0 0
        %1670 = vmatprep.mubr.bf16.mxu0 0
        %1671 = vmatmul.mubr.bf16.gmra.mrb[0].mxu0 %v1636
        %v1672 = vpop.f32.mrb[0].mxu0
        %v1673 = vadd.f32 %v1137, %v1672
        %v1674 = vpop.f32.mrb[0].mxu0
        %v1675 = vpop.f32.mrb[0].mxu0
        %v1676 = vpop.f32.mrb[0].mxu0
        %1677 = vdwg.mxu0
        %v1686 = vunpack.c.l.b16 %v836
        %v1687 = vunpack.c.l.b16 %v837
        %v1688 = vunpack.c.l.b16 %v838
        %v1689 = vunpack.c.l.b16 %v839
        %v1690 = vunpack.c.l.b16 %v840
        %v1691 = vunpack.c.l.b16 %v841
        %v1692 = vunpack.c.l.b16 %v842
        %v1693 = vunpack.c.l.b16 %v843
        %v1694 = vpack.c.b16 %v1687, %v1686
        %v1695 = vpack.c.b16 %v1689, %v1688
        %v1696 = vpack.c.b16 %v1691, %v1690
        %v1697 = vpack.c.b16 %v1693, %v1692
        %v1703 = vsel %vm964, %v755, 0
        %1705 = vmatprep.subr.bf16.mxu0 0
        %1706 = vmatpush1.bf16.msra.mxu0 %v1694
        %1707 = vmatprep.subr.bf16.mxu0 0
        %1708 = vmatpush1.bf16.msra.mxu0 %v1695
        %1709 = vmatprep.subr.bf16.mxu0 0
        %1710 = vmatpush1.bf16.msra.mxu0 %v1696
        %1711 = vmatprep.subr.bf16.mxu0 0
        %1712 = vmatpush1.bf16.msra.mxu0 %v1697
        %1713 = vmatprep.subr.bf16.mxu0 0
        %1714 = vmatpush1.bf16.msra.mxu0 0
        %1715 = vmatprep.subr.bf16.mxu0 0
        %1716 = vmatpush1.bf16.msra.mxu0 0
        %1717 = vmatprep.subr.bf16.mxu0 0
        %1718 = vmatpush1.bf16.msra.mxu0 0
        %1719 = vmatprep.subr.bf16.mxu0 0
        %1720 = vmatpush1.bf16.msra.mxu0 0
        %1721 = vmatprep.subr.bf16.mxu0 0
        %1722 = vmatpush1.bf16.msra.mxu0 0
        %1723 = vmatprep.subr.bf16.mxu0 0
        %1724 = vmatpush1.bf16.msra.mxu0 0
        %1725 = vmatprep.subr.bf16.mxu0 0
        %1726 = vmatpush1.bf16.msra.mxu0 0
        %1727 = vmatprep.subr.bf16.mxu0 0
        %1728 = vmatpush1.bf16.msra.mxu0 0
        %1729 = vmatprep.subr.bf16.mxu0 0
        %1730 = vmatpush1.bf16.msra.mxu0 0
        %1731 = vmatprep.subr.bf16.mxu0 0
        %1732 = vmatpush1.bf16.msra.mxu0 0
        %1733 = vmatprep.subr.bf16.mxu0 0
        %1734 = vmatpush1.bf16.msra.mxu0 0
        %1735 = vmatprep.subr.bf16.mxu0 0
        %1736 = vmatpush1.bf16.msra.mxu0 0
        %1737 = vmatprep.mubr.bf16.mxu0 0
        %1738 = vmatmul.mubr.bf16.gmra.mrb[0].mxu0 %v1703
        %v1739 = vpop.f32.mrb[0].mxu0
        %v1740 = vadd.f32 %v1204, %v1739
        %v1741 = vpop.f32.mrb[0].mxu0
        %v1742 = vpop.f32.mrb[0].mxu0
        %v1743 = vpop.f32.mrb[0].mxu0
        %1744 = vdwg.mxu0
        %v1753 = vunpack.c.l.b16 %v844
        %v1754 = vunpack.c.l.b16 %v845
        %v1755 = vunpack.c.l.b16 %v846
        %v1756 = vunpack.c.l.b16 %v847
        %v1757 = vunpack.c.l.b16 %v848
        %v1758 = vunpack.c.l.b16 %v849
        %v1759 = vunpack.c.l.b16 %v850
        %v1760 = vunpack.c.l.b16 %v851
        %v1761 = vpack.c.b16 %v1754, %v1753
        %v1762 = vpack.c.b16 %v1756, %v1755
        %v1763 = vpack.c.b16 %v1758, %v1757
        %v1764 = vpack.c.b16 %v1760, %v1759
        %v1770 = vsel %vm964, %v756, 0
        %1772 = vmatprep.subr.bf16.mxu0 0
        %1773 = vmatpush1.bf16.msra.mxu0 %v1761
        %1774 = vmatprep.subr.bf16.mxu0 0
        %1775 = vmatpush1.bf16.msra.mxu0 %v1762
        %1776 = vmatprep.subr.bf16.mxu0 0
        %1777 = vmatpush1.bf16.msra.mxu0 %v1763
        %1778 = vmatprep.subr.bf16.mxu0 0
        %1779 = vmatpush1.bf16.msra.mxu0 %v1764
        %1780 = vmatprep.subr.bf16.mxu0 0
        %1781 = vmatpush1.bf16.msra.mxu0 0
        %1782 = vmatprep.subr.bf16.mxu0 0
        %1783 = vmatpush1.bf16.msra.mxu0 0
        %1784 = vmatprep.subr.bf16.mxu0 0
        %1785 = vmatpush1.bf16.msra.mxu0 0
        %1786 = vmatprep.subr.bf16.mxu0 0
        %1787 = vmatpush1.bf16.msra.mxu0 0
        %1788 = vmatprep.subr.bf16.mxu0 0
        %1789 = vmatpush1.bf16.msra.mxu0 0
        %1790 = vmatprep.subr.bf16.mxu0 0
        %1791 = vmatpush1.bf16.msra.mxu0 0
        %1792 = vmatprep.subr.bf16.mxu0 0
        %1793 = vmatpush1.bf16.msra.mxu0 0
        %1794 = vmatprep.subr.bf16.mxu0 0
        %1795 = vmatpush1.bf16.msra.mxu0 0
        %1796 = vmatprep.subr.bf16.mxu0 0
        %1797 = vmatpush1.bf16.msra.mxu0 0
        %1798 = vmatprep.subr.bf16.mxu0 0
        %1799 = vmatpush1.bf16.msra.mxu0 0
        %1800 = vmatprep.subr.bf16.mxu0 0
        %1801 = vmatpush1.bf16.msra.mxu0 0
        %1802 = vmatprep.subr.bf16.mxu0 0
        %1803 = vmatpush1.bf16.msra.mxu0 0
        %1804 = vmatprep.mubr.bf16.mxu0 0
        %1805 = vmatmul.mubr.bf16.gmra.mrb[0].mxu0 %v1770
        %v1806 = vpop.f32.mrb[0].mxu0
        %v1807 = vadd.f32 %v1271, %v1806
        %v1808 = vpop.f32.mrb[0].mxu0
        %v1809 = vpop.f32.mrb[0].mxu0
        %v1810 = vpop.f32.mrb[0].mxu0
        %1811 = vdwg.mxu0
        %v1820 = vunpack.c.l.b16 %v852
        %v1821 = vunpack.c.l.b16 %v853
        %v1822 = vunpack.c.l.b16 %v854
        %v1823 = vunpack.c.l.b16 %v855
        %v1824 = vunpack.c.l.b16 %v856
        %v1825 = vunpack.c.l.b16 %v857
        %v1826 = vunpack.c.l.b16 %v858
        %v1827 = vunpack.c.l.b16 %v859
        %v1828 = vpack.c.b16 %v1821, %v1820
        %v1829 = vpack.c.b16 %v1823, %v1822
        %v1830 = vpack.c.b16 %v1825, %v1824
        %v1831 = vpack.c.b16 %v1827, %v1826
        %v1837 = vsel %vm964, %v757, 0
        %1839 = vmatprep.subr.bf16.mxu0 0
        %1840 = vmatpush1.bf16.msra.mxu0 %v1828
        %1841 = vmatprep.subr.bf16.mxu0 0
        %1842 = vmatpush1.bf16.msra.mxu0 %v1829
        %1843 = vmatprep.subr.bf16.mxu0 0
        %1844 = vmatpush1.bf16.msra.mxu0 %v1830
        %1845 = vmatprep.subr.bf16.mxu0 0
        %1846 = vmatpush1.bf16.msra.mxu0 %v1831
        %1847 = vmatprep.subr.bf16.mxu0 0
        %1848 = vmatpush1.bf16.msra.mxu0 0
        %1849 = vmatprep.subr.bf16.mxu0 0
        %1850 = vmatpush1.bf16.msra.mxu0 0
        %1851 = vmatprep.subr.bf16.mxu0 0
        %1852 = vmatpush1.bf16.msra.mxu0 0
        %1853 = vmatprep.subr.bf16.mxu0 0
        %1854 = vmatpush1.bf16.msra.mxu0 0
        %1855 = vmatprep.subr.bf16.mxu0 0
        %1856 = vmatpush1.bf16.msra.mxu0 0
        %1857 = vmatprep.subr.bf16.mxu0 0
        %1858 = vmatpush1.bf16.msra.mxu0 0
        %1859 = vmatprep.subr.bf16.mxu0 0
        %1860 = vmatpush1.bf16.msra.mxu0 0
        %1861 = vmatprep.subr.bf16.mxu0 0
        %1862 = vmatpush1.bf16.msra.mxu0 0
        %1863 = vmatprep.subr.bf16.mxu0 0
        %1864 = vmatpush1.bf16.msra.mxu0 0
        %1865 = vmatprep.subr.bf16.mxu0 0
        %1866 = vmatpush1.bf16.msra.mxu0 0
        %1867 = vmatprep.subr.bf16.mxu0 0
        %1868 = vmatpush1.bf16.msra.mxu0 0
        %1869 = vmatprep.subr.bf16.mxu0 0
        %1870 = vmatpush1.bf16.msra.mxu0 0
        %1871 = vmatprep.mubr.bf16.mxu0 0
        %1872 = vmatmul.mubr.bf16.gmra.mrb[0].mxu0 %v1837
        %v1873 = vpop.f32.mrb[0].mxu0
        %v1874 = vadd.f32 %v1338, %v1873
        %v1875 = vpop.f32.mrb[0].mxu0
        %v1876 = vpop.f32.mrb[0].mxu0
        %v1877 = vpop.f32.mrb[0].mxu0
        %1878 = vdwg.mxu0
        %v1887 = vunpack.c.l.b16 %v860
        %v1888 = vunpack.c.l.b16 %v861
        %v1889 = vunpack.c.l.b16 %v862
        %v1890 = vunpack.c.l.b16 %v863
        %v1891 = vunpack.c.l.b16 %v864
        %v1892 = vunpack.c.l.b16 %v865
        %v1893 = vunpack.c.l.b16 %v866
        %v1894 = vunpack.c.l.b16 %v867
        %v1895 = vpack.c.b16 %v1888, %v1887
        %v1896 = vpack.c.b16 %v1890, %v1889
        %v1897 = vpack.c.b16 %v1892, %v1891
        %v1898 = vpack.c.b16 %v1894, %v1893
        %v1904 = vsel %vm964, %v758, 0
        %1906 = vmatprep.subr.bf16.mxu0 0
        %1907 = vmatpush1.bf16.msra.mxu0 %v1895
        %1908 = vmatprep.subr.bf16.mxu0 0
        %1909 = vmatpush1.bf16.msra.mxu0 %v1896
        %1910 = vmatprep.subr.bf16.mxu0 0
        %1911 = vmatpush1.bf16.msra.mxu0 %v1897
        %1912 = vmatprep.subr.bf16.mxu0 0
        %1913 = vmatpush1.bf16.msra.mxu0 %v1898
        %1914 = vmatprep.subr.bf16.mxu0 0
        %1915 = vmatpush1.bf16.msra.mxu0 0
        %1916 = vmatprep.subr.bf16.mxu0 0
        %1917 = vmatpush1.bf16.msra.mxu0 0
        %1918 = vmatprep.subr.bf16.mxu0 0
        %1919 = vmatpush1.bf16.msra.mxu0 0
        %1920 = vmatprep.subr.bf16.mxu0 0
        %1921 = vmatpush1.bf16.msra.mxu0 0
        %1922 = vmatprep.subr.bf16.mxu0 0
        %1923 = vmatpush1.bf16.msra.mxu0 0
        %1924 = vmatprep.subr.bf16.mxu0 0
        %1925 = vmatpush1.bf16.msra.mxu0 0
        %1926 = vmatprep.subr.bf16.mxu0 0
        %1927 = vmatpush1.bf16.msra.mxu0 0
        %1928 = vmatprep.subr.bf16.mxu0 0
        %1929 = vmatpush1.bf16.msra.mxu0 0
        %1930 = vmatprep.subr.bf16.mxu0 0
        %1931 = vmatpush1.bf16.msra.mxu0 0
        %1932 = vmatprep.subr.bf16.mxu0 0
        %1933 = vmatpush1.bf16.msra.mxu0 0
        %1934 = vmatprep.subr.bf16.mxu0 0
        %1935 = vmatpush1.bf16.msra.mxu0 0
        %1936 = vmatprep.subr.bf16.mxu0 0
        %1937 = vmatpush1.bf16.msra.mxu0 0
        %1938 = vmatprep.mubr.bf16.mxu0 0
        %1939 = vmatmul.mubr.bf16.gmra.mrb[0].mxu0 %v1904
        %v1940 = vpop.f32.mrb[0].mxu0
        %v1941 = vadd.f32 %v1405, %v1940
        %v1942 = vpop.f32.mrb[0].mxu0
        %v1943 = vpop.f32.mrb[0].mxu0
        %v1944 = vpop.f32.mrb[0].mxu0
        %1945 = vdwg.mxu0
        %v1954 = vunpack.c.l.b16 %v868
        %v1955 = vunpack.c.l.b16 %v869
        %v1956 = vunpack.c.l.b16 %v870
        %v1957 = vunpack.c.l.b16 %v871
        %v1958 = vunpack.c.l.b16 %v872
        %v1959 = vunpack.c.l.b16 %v873
        %v1960 = vunpack.c.l.b16 %v874
        %v1961 = vunpack.c.l.b16 %v875
        %v1962 = vpack.c.b16 %v1955, %v1954
        %v1963 = vpack.c.b16 %v1957, %v1956
        %v1964 = vpack.c.b16 %v1959, %v1958
        %v1965 = vpack.c.b16 %v1961, %v1960
        %v1971 = vsel %vm964, %v759, 0
        %1973 = vmatprep.subr.bf16.mxu0 0
        %1974 = vmatpush1.bf16.msra.mxu0 %v1962
        %1975 = vmatprep.subr.bf16.mxu0 0
        %1976 = vmatpush1.bf16.msra.mxu0 %v1963
        %1977 = vmatprep.subr.bf16.mxu0 0
        %1978 = vmatpush1.bf16.msra.mxu0 %v1964
        %1979 = vmatprep.subr.bf16.mxu0 0
        %1980 = vmatpush1.bf16.msra.mxu0 %v1965
        %1981 = vmatprep.subr.bf16.mxu0 0
        %1982 = vmatpush1.bf16.msra.mxu0 0
        %1983 = vmatprep.subr.bf16.mxu0 0
        %1984 = vmatpush1.bf16.msra.mxu0 0
        %1985 = vmatprep.subr.bf16.mxu0 0
        %1986 = vmatpush1.bf16.msra.mxu0 0
        %1987 = vmatprep.subr.bf16.mxu0 0
        %1988 = vmatpush1.bf16.msra.mxu0 0
        %1989 = vmatprep.subr.bf16.mxu0 0
        %1990 = vmatpush1.bf16.msra.mxu0 0
        %1991 = vmatprep.subr.bf16.mxu0 0
        %1992 = vmatpush1.bf16.msra.mxu0 0
        %1993 = vmatprep.subr.bf16.mxu0 0
        %1994 = vmatpush1.bf16.msra.mxu0 0
        %1995 = vmatprep.subr.bf16.mxu0 0
        %1996 = vmatpush1.bf16.msra.mxu0 0
        %1997 = vmatprep.subr.bf16.mxu0 0
        %1998 = vmatpush1.bf16.msra.mxu0 0
        %1999 = vmatprep.subr.bf16.mxu0 0
        %2000 = vmatpush1.bf16.msra.mxu0 0
        %2001 = vmatprep.subr.bf16.mxu0 0
        %2002 = vmatpush1.bf16.msra.mxu0 0
        %2003 = vmatprep.subr.bf16.mxu0 0
        %2004 = vmatpush1.bf16.msra.mxu0 0
        %2005 = vmatprep.mubr.bf16.mxu0 0
        %2006 = vmatmul.mubr.bf16.gmra.mrb[0].mxu0 %v1971
        %v2007 = vpop.f32.mrb[0].mxu0
        %v2008 = vadd.f32 %v1472, %v2007
        %v2009 = vpop.f32.mrb[0].mxu0
        %v2010 = vpop.f32.mrb[0].mxu0
        %v2011 = vpop.f32.mrb[0].mxu0
        %2012 = vdwg.mxu0
        %v2013 = vld [vmem:[%s4] sm:$0xf]
        %v2014 = vld [vmem:[%s4 + $0x4] sm:$0xf]
        %v2015 = vld [vmem:[%s4 + $0x8] sm:$0xf]
        %v2016 = vld [vmem:[%s4 + $0xc] sm:$0xf]
        %v2025 = vcombine.low %v1539, %v1606
        %v2026 = vcombine.low %v1673, %v1740
        %v2028 = vunpack.c.l.s4 1983009808
        %v2029 = vunpack.c.0.s8 %v2028
        %v2030 = vlaneseq
        %v2031 = vshrl.u32 %v2030, 7
        %v2032 = vsub.s32 %v2029, %v2031
        %v2033 = vrot.slane %v2025, %v2032
        %v2035 = vunpack.c.l.s4 1983009808
        %v2036 = vunpack.c.0.s8 %v2035
        %v2037 = vlaneseq
        %v2038 = vshrl.u32 %v2037, 7
        %v2039 = vsub.s32 %v2036, %v2038
        %v2040 = vrot.slane %v2026, %v2039
        %v2041 = vcombine.low %v2033, %v2040
        %v2042 = vcombine.low %v1807, %v1874
        %v2043 = vcombine.low %v1941, %v2008
        %v2045 = vunpack.c.l.s4 1983009808
        %v2046 = vunpack.c.0.s8 %v2045
        %v2047 = vlaneseq
        %v2048 = vshrl.u32 %v2047, 7
        %v2049 = vsub.s32 %v2046, %v2048
        %v2050 = vrot.slane %v2042, %v2049
        %v2052 = vunpack.c.l.s4 1983009808
        %v2053 = vunpack.c.0.s8 %v2052
        %v2054 = vlaneseq
        %v2055 = vshrl.u32 %v2054, 7
        %v2056 = vsub.s32 %v2053, %v2055
        %v2057 = vrot.slane %v2043, %v2056
        %v2058 = vcombine.low %v2050, %v2057
        %v2061 = vpack.c.bf16 %v2058, %v2041
        %v2062 = vld [vmem:[%s5] sm:$0xf]
        %v2063 = vld [vmem:[%s5 + $0x4] sm:$0xf]
        %v2064 = vld [vmem:[%s5 + $0x8] sm:$0xf]
        %v2065 = vld [vmem:[%s5 + $0xc] sm:$0xf]
        %v2070 = vunpack.c.l.b16 %v2062
        %v2071 = vunpack.c.l.b16 %v2063
        %v2072 = vunpack.c.l.b16 %v2064
        %v2073 = vunpack.c.l.b16 %v2065
        %v2074 = vpack.c.b16 %v2071, %v2070
        %v2075 = vpack.c.b16 %v2073, %v2072
        %2077 = vrot.lane.b32.xlu0 %v2061, 64
        %v2078 = vpop.permute.xlu0 %2077
        %vm2080 = vcmask 130048
        %v2082 = vsel %vm2080, %v2074, 0
        %v2085 = vsel %vm2080, %v2075, 0
        %2087 = vmatprep.subr.bf16.mxu0 0
        %2088 = vmatpush1.bf16.msra.mxu0 %v2078
        %2089 = vmatprep.subr.bf16.mxu0 0
        %2090 = vmatpush1.bf16.msra.mxu0 0
        %2091 = vmatprep.subr.bf16.mxu0 0
        %2092 = vmatpush1.bf16.msra.mxu0 0
        %2093 = vmatprep.subr.bf16.mxu0 0
        %2094 = vmatpush1.bf16.msra.mxu0 0
        %2095 = vmatprep.subr.bf16.mxu0 0
        %2096 = vmatpush1.bf16.msra.mxu0 0
        %2097 = vmatprep.subr.bf16.mxu0 0
        %2098 = vmatpush1.bf16.msra.mxu0 0
        %2099 = vmatprep.subr.bf16.mxu0 0
        %2100 = vmatpush1.bf16.msra.mxu0 0
        %2101 = vmatprep.subr.bf16.mxu0 0
        %2102 = vmatpush1.bf16.msra.mxu0 0
        %2103 = vmatprep.subr.bf16.mxu0 0
        %2104 = vmatpush1.bf16.msra.mxu0 0
        %2105 = vmatprep.subr.bf16.mxu0 0
        %2106 = vmatpush1.bf16.msra.mxu0 0
        %2107 = vmatprep.subr.bf16.mxu0 0
        %2108 = vmatpush1.bf16.msra.mxu0 0
        %2109 = vmatprep.subr.bf16.mxu0 0
        %2110 = vmatpush1.bf16.msra.mxu0 0
        %2111 = vmatprep.subr.bf16.mxu0 0
        %2112 = vmatpush1.bf16.msra.mxu0 0
        %2113 = vmatprep.subr.bf16.mxu0 0
        %2114 = vmatpush1.bf16.msra.mxu0 0
        %2115 = vmatprep.subr.bf16.mxu0 0
        %2116 = vmatpush1.bf16.msra.mxu0 0
        %2117 = vmatprep.subr.bf16.mxu0 0
        %2118 = vmatpush1.bf16.msra.mxu0 0
        %2119 = vmatprep.mubr.bf16.mxu0 0
        %2120 = vmatmul.mubr.bf16.gmra.mrb[0].mxu0 %v2082
        %v2121 = vpop.f32.mrb[0].mxu0
        %v2122 = vadd.f32 0.0, %v2121
        %v2123 = vpop.f32.mrb[0].mxu0
        %v2124 = vpop.f32.mrb[0].mxu0
        %v2125 = vadd.f32 0.0, %v2124
        %v2126 = vpop.f32.mrb[0].mxu0
        %2127 = vmatprep.mubr.bf16.mxu0 0
        %2128 = vmatmul.mubr.bf16.gmra.mrb[0].mxu0 %v2085
        %v2129 = vpop.f32.mrb[0].mxu0
        %v2130 = vadd.f32 0.0, %v2129
        %v2131 = vpop.f32.mrb[0].mxu0
        %v2132 = vpop.f32.mrb[0].mxu0
        %v2133 = vadd.f32 0.0, %v2132
        %v2134 = vpop.f32.mrb[0].mxu0
        %2135 = vdwg.mxu0
        %v2140 = vunpack.c.l.b16 %v2013
        %v2141 = vunpack.c.l.b16 %v2014
        %v2142 = vunpack.c.l.b16 %v2015
        %v2143 = vunpack.c.l.b16 %v2016
        %v2144 = vpack.c.b16 %v2141, %v2140
        %v2145 = vpack.c.b16 %v2143, %v2142
        %v2147 = vsel %vm2080, %v2144, 0
        %v2150 = vsel %vm2080, %v2145, 0
        %2152 = vmatprep.subr.bf16.mxu0 0
        %2153 = vmatpush1.bf16.msra.mxu0 %v2061
        %2154 = vmatprep.subr.bf16.mxu0 0
        %2155 = vmatpush1.bf16.msra.mxu0 0
        %2156 = vmatprep.subr.bf16.mxu0 0
        %2157 = vmatpush1.bf16.msra.mxu0 0
        %2158 = vmatprep.subr.bf16.mxu0 0
        %2159 = vmatpush1.bf16.msra.mxu0 0
        %2160 = vmatprep.subr.bf16.mxu0 0
        %2161 = vmatpush1.bf16.msra.mxu0 0
        %2162 = vmatprep.subr.bf16.mxu0 0
        %2163 = vmatpush1.bf16.msra.mxu0 0
        %2164 = vmatprep.subr.bf16.mxu0 0
        %2165 = vmatpush1.bf16.msra.mxu0 0
        %2166 = vmatprep.subr.bf16.mxu0 0
        %2167 = vmatpush1.bf16.msra.mxu0 0
        %2168 = vmatprep.subr.bf16.mxu0 0
        %2169 = vmatpush1.bf16.msra.mxu0 0
        %2170 = vmatprep.subr.bf16.mxu0 0
        %2171 = vmatpush1.bf16.msra.mxu0 0
        %2172 = vmatprep.subr.bf16.mxu0 0
        %2173 = vmatpush1.bf16.msra.mxu0 0
        %2174 = vmatprep.subr.bf16.mxu0 0
        %2175 = vmatpush1.bf16.msra.mxu0 0
        %2176 = vmatprep.subr.bf16.mxu0 0
        %2177 = vmatpush1.bf16.msra.mxu0 0
        %2178 = vmatprep.subr.bf16.mxu0 0
        %2179 = vmatpush1.bf16.msra.mxu0 0
        %2180 = vmatprep.subr.bf16.mxu0 0
        %2181 = vmatpush1.bf16.msra.mxu0 0
        %2182 = vmatprep.subr.bf16.mxu0 0
        %2183 = vmatpush1.bf16.msra.mxu0 0
        %2184 = vmatprep.mubr.bf16.mxu0 0
        %2185 = vmatmul.mubr.bf16.gmra.mrb[0].mxu0 %v2147
        %v2186 = vpop.f32.mrb[0].mxu0
        %v2187 = vadd.f32 %v2122, %v2186
        %v2188 = vpop.f32.mrb[0].mxu0
        %v2189 = vpop.f32.mrb[0].mxu0
        %v2190 = vadd.f32 %v2125, %v2189
        %v2191 = vpop.f32.mrb[0].mxu0
        %2192 = vmatprep.mubr.bf16.mxu0 0
        %2193 = vmatmul.mubr.bf16.gmra.mrb[0].mxu0 %v2150
        %v2194 = vpop.f32.mrb[0].mxu0
        %v2195 = vadd.f32 %v2130, %v2194
        %v2196 = vpop.f32.mrb[0].mxu0
        %v2197 = vpop.f32.mrb[0].mxu0
        %v2198 = vadd.f32 %v2133, %v2197
        %v2199 = vpop.f32.mrb[0].mxu0
        %2200 = vdwg.mxu0
        %v2201 = vld [vmem:[%s545] sm:$0xf]
        %v2202 = vld [vmem:[%s545 + $0x4] sm:$0xf]
        %v2203 = vld [vmem:[%s545 + $0x8] sm:$0xf]
        %v2204 = vld [vmem:[%s545 + $0xc] sm:$0xf]
        %v2205 = vld [vmem:[%s545 + $0x10] sm:$0xf]
        %v2206 = vld [vmem:[%s545 + $0x14] sm:$0xf]
        %v2207 = vld [vmem:[%s545 + $0x18] sm:$0xf]
        %v2208 = vld [vmem:[%s545 + $0x1c] sm:$0xf]
        %v2209 = vld [vmem:[%s548] sm:$0x1]
        %v2211 = vlaneseq
        %v2212 = vshrl.u32 %v2211, 7
        %v2213 = vsub.s32 0, %v2212
        %v2214 = vrot.slane %v2209, %v2213
        %v2224 = vunpack.c.l.b16 %v2201
        %v2225 = vunpack.c.l.b16 %v2202
        %v2226 = vunpack.c.l.b16 %v2203
        %v2227 = vunpack.c.l.b16 %v2204
        %v2228 = vunpack.c.l.b16 %v2205
        %v2229 = vunpack.c.l.b16 %v2206
        %v2230 = vunpack.c.l.b16 %v2207
        %v2231 = vunpack.c.l.b16 %v2208
        %v2232 = vpack.c.b16 %v2225, %v2224
        %v2233 = vpack.c.b16 %v2227, %v2226
        %v2234 = vpack.c.b16 %v2229, %v2228
        %v2235 = vpack.c.b16 %v2231, %v2230
        %v2241 = vsel %vm964, %v636, 0
        %v2244 = vsel %vm964, %v637, 0
        %2246 = vmatprep.subr.bf16.mxu0 0
        %2247 = vmatpush1.bf16.msra.mxu0 %v2232
        %2248 = vmatprep.subr.bf16.mxu0 0
        %2249 = vmatpush1.bf16.msra.mxu0 %v2233
        %2250 = vmatprep.subr.bf16.mxu0 0
        %2251 = vmatpush1.bf16.msra.mxu0 %v2234
        %2252 = vmatprep.subr.bf16.mxu0 0
        %2253 = vmatpush1.bf16.msra.mxu0 %v2235
        %2254 = vmatprep.subr.bf16.mxu0 0
        %2255 = vmatpush1.bf16.msra.mxu0 0
        %2256 = vmatprep.subr.bf16.mxu0 0
        %2257 = vmatpush1.bf16.msra.mxu0 0
        %2258 = vmatprep.subr.bf16.mxu0 0
        %2259 = vmatpush1.bf16.msra.mxu0 0
        %2260 = vmatprep.subr.bf16.mxu0 0
        %2261 = vmatpush1.bf16.msra.mxu0 0
        %2262 = vmatprep.subr.bf16.mxu0 0
        %2263 = vmatpush1.bf16.msra.mxu0 0
        %2264 = vmatprep.subr.bf16.mxu0 0
        %2265 = vmatpush1.bf16.msra.mxu0 0
        %2266 = vmatprep.subr.bf16.mxu0 0
        %2267 = vmatpush1.bf16.msra.mxu0 0
        %2268 = vmatprep.subr.bf16.mxu0 0
        %2269 = vmatpush1.bf16.msra.mxu0 0
        %2270 = vmatprep.subr.bf16.mxu0 0
        %2271 = vmatpush1.bf16.msra.mxu0 0
        %2272 = vmatprep.subr.bf16.mxu0 0
        %2273 = vmatpush1.bf16.msra.mxu0 0
        %2274 = vmatprep.subr.bf16.mxu0 0
        %2275 = vmatpush1.bf16.msra.mxu0 0
        %2276 = vmatprep.subr.bf16.mxu0 0
        %2277 = vmatpush1.bf16.msra.mxu0 0
        %2278 = vmatprep.mubr.bf16.mxu0 0
        %2279 = vmatmul.mubr.bf16.gmra.mrb[0].mxu0 %v2241
        %v2280 = vpop.f32.mrb[0].mxu0
        %v2281 = vadd.f32 %v2214, %v2280
        %v2282 = vpop.f32.mrb[0].mxu0
        %v2283 = vpop.f32.mrb[0].mxu0
        %v2284 = vadd.f32 %v2214, %v2283
        %v2285 = vpop.f32.mrb[0].mxu0
        %2286 = vmatprep.mubr.bf16.mxu0 0
        %2287 = vmatmul.mubr.bf16.gmra.mrb[0].mxu0 %v2244
        %v2288 = vpop.f32.mrb[0].mxu0
        %v2289 = vadd.f32 %v2214, %v2288
        %v2290 = vpop.f32.mrb[0].mxu0
        %v2291 = vpop.f32.mrb[0].mxu0
        %v2292 = vadd.f32 %v2214, %v2291
        %v2293 = vpop.f32.mrb[0].mxu0
        %2294 = vdwg.mxu0
        %v2295 = vadd.f32 %v2187, %v2281
        %v2296 = vadd.f32 %v2190, %v2284
        %v2297 = vadd.f32 %v2195, %v2289
        %v2298 = vadd.f32 %v2198, %v2292
        %p2299 = scmp.lt.s32.totalorder %s33, 3
        // Predicated region
        $region89: #{fno1d_forward_pallas.1} parent=75 // pred_check
          %p2300 = pneg %p2299
        $region90: #{fno1d_forward_pallas.1} parent=75 // pred_check_branch
          %2302 = sbr.rel (%p2300) target = $region92
        $region91: #{fno1d_forward_pallas.1} parent=75 // pred_region
          %v2303 = vmul.f32 %v2295, 0.5
          %v2304 = vmul.f32 %v2296, 0.5
          %v2305 = vmul.f32 %v2297, 0.5
          %v2306 = vmul.f32 %v2298, 0.5
          %v2307 = vmul.f32 %v2295, %v2295
          %v2308 = vmul.f32 %v2296, %v2296
          %v2309 = vmul.f32 %v2297, %v2297
          %v2310 = vmul.f32 %v2298, %v2298
          %v2311 = vmul.f32 %v2307, %v2295
          %v2312 = vmul.f32 %v2308, %v2296
          %v2313 = vmul.f32 %v2309, %v2297
          %v2314 = vmul.f32 %v2310, %v2298
          %v2315 = vmul.f32 %v2311, 0.044715
          %v2316 = vmul.f32 %v2312, 0.044715
          %v2317 = vmul.f32 %v2313, 0.044715
          %v2318 = vmul.f32 %v2314, 0.044715
          %v2319 = vadd.f32 %v2295, %v2315
          %v2320 = vadd.f32 %v2296, %v2316
          %v2321 = vadd.f32 %v2297, %v2317
          %v2322 = vadd.f32 %v2298, %v2318
          %v2323 = vmul.f32 %v2319, 0.7978846
          %v2324 = vmul.f32 %v2320, 0.7978846
          %v2325 = vmul.f32 %v2321, 0.7978846
          %v2326 = vmul.f32 %v2322, 0.7978846
          %v2327 = vtanh.pop %v2323
          %v2328 = vtanh.pop %v2324
          %v2329 = vtanh.pop %v2325
          %v2330 = vtanh.pop %v2326
          %v2331 = vadd.f32 %v2327, 1.0
          %v2332 = vadd.f32 %v2328, 1.0
          %v2333 = vadd.f32 %v2329, 1.0
          %v2334 = vadd.f32 %v2330, 1.0
          %v2335 = vmul.f32 %v2303, %v2331
          %v2336 = vmul.f32 %v2304, %v2332
          %v2337 = vmul.f32 %v2305, %v2333
          %v2338 = vmul.f32 %v2306, %v2334
          %2339 = vst.msk [vmem:[#allocation2] sm:$0xff] %vm964, %v2335
          %2340 = vst.msk [vmem:[#allocation2 + $0x8] sm:$0xff] %vm964, %v2336
          %2341 = vst.msk [vmem:[#allocation2 + $0x10] sm:$0xff] %vm964, %v2337
          %2342 = vst.msk [vmem:[#allocation2 + $0x18] sm:$0xff] %vm964, %v2338
        $region92: #{fno1d_forward_pallas.1} parent=75 // pred_fallthru
          _
        %p2343 = scmp.eq.s32.totalorder %s33, 3
        // Predicated region
        $region93: #{fno1d_forward_pallas.1} parent=75 // pred_check
          %p2344 = pneg %p2343
        $region94: #{fno1d_forward_pallas.1} parent=75 // pred_check_branch
          %2346 = sbr.rel (%p2344) target = $region96
        $region95: #{fno1d_forward_pallas.1} parent=75 // pred_region
          %v2347 = vpack.c.bf16 %v2296, %v2295
          %v2348 = vpack.c.bf16 %v2298, %v2297
          %v2349 = vld [vmem:[%s10] sm:$0xf]
          %v2350 = vld [vmem:[%s10 + $0x4] sm:$0xf]
          %v2351 = vld [vmem:[%s10 + $0x8] sm:$0xf]
          %v2352 = vld [vmem:[%s10 + $0xc] sm:$0xf]
          %v2353 = vld [vmem:[%s10 + $0x10] sm:$0xf]
          %v2354 = vld [vmem:[%s10 + $0x14] sm:$0xf]
          %v2355 = vld [vmem:[%s10 + $0x18] sm:$0xf]
          %v2356 = vld [vmem:[%s10 + $0x1c] sm:$0xf]
          %v2357 = vld [vmem:[%s11] sm:$0x1]
          %v2359 = vlaneseq
          %v2360 = vshrl.u32 %v2359, 7
          %v2361 = vsub.s32 0, %v2360
          %v2362 = vrot.slane %v2357, %v2361
          %v2372 = vunpack.c.l.b16 %v2349
          %v2373 = vunpack.c.l.b16 %v2350
          %v2374 = vunpack.c.l.b16 %v2351
          %v2375 = vunpack.c.l.b16 %v2352
          %v2376 = vunpack.c.l.b16 %v2353
          %v2377 = vunpack.c.l.b16 %v2354
          %v2378 = vunpack.c.l.b16 %v2355
          %v2379 = vunpack.c.l.b16 %v2356
          %v2380 = vpack.c.b16 %v2373, %v2372
          %v2381 = vpack.c.b16 %v2375, %v2374
          %v2382 = vpack.c.b16 %v2377, %v2376
          %v2383 = vpack.c.b16 %v2379, %v2378
          %v2389 = vsel %vm964, %v2347, 0
          %v2392 = vsel %vm964, %v2348, 0
          %2394 = vmatprep.subr.bf16.mxu0 0
          %2395 = vmatpush1.bf16.msra.mxu0 %v2380
          %2396 = vmatprep.subr.bf16.mxu0 0
          %2397 = vmatpush1.bf16.msra.mxu0 %v2381
          %2398 = vmatprep.subr.bf16.mxu0 0
          %2399 = vmatpush1.bf16.msra.mxu0 %v2382
          %2400 = vmatprep.subr.bf16.mxu0 0
          %2401 = vmatpush1.bf16.msra.mxu0 %v2383
          %2402 = vmatprep.subr.bf16.mxu0 0
          %2403 = vmatpush1.bf16.msra.mxu0 0
          %2404 = vmatprep.subr.bf16.mxu0 0
          %2405 = vmatpush1.bf16.msra.mxu0 0
          %2406 = vmatprep.subr.bf16.mxu0 0
          %2407 = vmatpush1.bf16.msra.mxu0 0
          %2408 = vmatprep.subr.bf16.mxu0 0
          %2409 = vmatpush1.bf16.msra.mxu0 0
          %2410 = vmatprep.subr.bf16.mxu0 0
          %2411 = vmatpush1.bf16.msra.mxu0 0
          %2412 = vmatprep.subr.bf16.mxu0 0
          %2413 = vmatpush1.bf16.msra.mxu0 0
          %2414 = vmatprep.subr.bf16.mxu0 0
          %2415 = vmatpush1.bf16.msra.mxu0 0
          %2416 = vmatprep.subr.bf16.mxu0 0
          %2417 = vmatpush1.bf16.msra.mxu0 0
          %2418 = vmatprep.subr.bf16.mxu0 0
          %2419 = vmatpush1.bf16.msra.mxu0 0
          %2420 = vmatprep.subr.bf16.mxu0 0
          %2421 = vmatpush1.bf16.msra.mxu0 0
          %2422 = vmatprep.subr.bf16.mxu0 0
          %2423 = vmatpush1.bf16.msra.mxu0 0
          %2424 = vmatprep.subr.bf16.mxu0 0
          %2425 = vmatpush1.bf16.msra.mxu0 0
          %2426 = vmatprep.mubr.bf16.mxu0 0
          %2427 = vmatmul.mubr.bf16.gmra.mrb[0].mxu0 %v2389
          %v2428 = vpop.f32.mrb[0].mxu0
          %v2429 = vadd.f32 %v2362, %v2428
          %v2430 = vpop.f32.mrb[0].mxu0
          %v2431 = vpop.f32.mrb[0].mxu0
          %v2432 = vadd.f32 %v2362, %v2431
          %v2433 = vpop.f32.mrb[0].mxu0
          %2434 = vmatprep.mubr.bf16.mxu0 0
          %2435 = vmatmul.mubr.bf16.gmra.mrb[0].mxu0 %v2392
          %v2436 = vpop.f32.mrb[0].mxu0
          %v2437 = vadd.f32 %v2362, %v2436
          %v2438 = vpop.f32.mrb[0].mxu0
          %v2439 = vpop.f32.mrb[0].mxu0
          %v2440 = vadd.f32 %v2362, %v2439
          %v2441 = vpop.f32.mrb[0].mxu0
          %2442 = vdwg.mxu0
          %v2443 = vmul.f32 %v2429, 0.5
          %v2444 = vmul.f32 %v2432, 0.5
          %v2445 = vmul.f32 %v2437, 0.5
          %v2446 = vmul.f32 %v2440, 0.5
          %v2447 = vmul.f32 %v2429, %v2429
          %v2448 = vmul.f32 %v2432, %v2432
          %v2449 = vmul.f32 %v2437, %v2437
          %v2450 = vmul.f32 %v2440, %v2440
          %v2451 = vmul.f32 %v2447, %v2429
          %v2452 = vmul.f32 %v2448, %v2432
          %v2453 = vmul.f32 %v2449, %v2437
          %v2454 = vmul.f32 %v2450, %v2440
          %v2455 = vmul.f32 %v2451, 0.044715
          %v2456 = vmul.f32 %v2452, 0.044715
          %v2457 = vmul.f32 %v2453, 0.044715
          %v2458 = vmul.f32 %v2454, 0.044715
          %v2459 = vadd.f32 %v2429, %v2455
          %v2460 = vadd.f32 %v2432, %v2456
          %v2461 = vadd.f32 %v2437, %v2457
          %v2462 = vadd.f32 %v2440, %v2458
          %v2463 = vmul.f32 %v2459, 0.7978846
          %v2464 = vmul.f32 %v2460, 0.7978846
          %v2465 = vmul.f32 %v2461, 0.7978846
          %v2466 = vmul.f32 %v2462, 0.7978846
          %v2467 = vtanh.pop %v2463
          %v2468 = vtanh.pop %v2464
          %v2469 = vtanh.pop %v2465
          %v2470 = vtanh.pop %v2466
          %v2471 = vadd.f32 %v2467, 1.0
          %v2472 = vadd.f32 %v2468, 1.0
          %v2473 = vadd.f32 %v2469, 1.0
          %v2474 = vadd.f32 %v2470, 1.0
          %v2475 = vmul.f32 %v2443, %v2471
          %v2476 = vmul.f32 %v2444, %v2472
          %v2477 = vmul.f32 %v2445, %v2473
          %v2478 = vmul.f32 %v2446, %v2474
          %v2479 = vpack.c.bf16 %v2476, %v2475
          %v2480 = vpack.c.bf16 %v2478, %v2477
          %v2481 = vld [vmem:[%s12] sm:$0xf]
          %v2482 = vld [vmem:[%s12 + $0x4] sm:$0xf]
          %v2483 = vld [vmem:[%s12 + $0x8] sm:$0xf]
          %v2484 = vld [vmem:[%s12 + $0xc] sm:$0xf]
          %v2485 = vld [vmem:[%s12 + $0x10] sm:$0xf]
          %v2486 = vld [vmem:[%s12 + $0x14] sm:$0xf]
          %v2487 = vld [vmem:[%s12 + $0x18] sm:$0xf]
          %v2488 = vld [vmem:[%s12 + $0x1c] sm:$0xf]
          %v2489 = vld [vmem:[%s12 + $0x20] sm:$0xf]
          %v2490 = vld [vmem:[%s12 + $0x24] sm:$0xf]
          %v2491 = vld [vmem:[%s12 + $0x28] sm:$0xf]
          %v2492 = vld [vmem:[%s12 + $0x2c] sm:$0xf]
          %v2493 = vld [vmem:[%s12 + $0x30] sm:$0xf]
          %v2494 = vld [vmem:[%s12 + $0x34] sm:$0xf]
          %v2495 = vld [vmem:[%s12 + $0x38] sm:$0xf]
          %v2496 = vld [vmem:[%s12 + $0x3c] sm:$0xf]
          %v2497 = vld [vmem:[#allocation3] sm:$0x1]
          %v2499 = vlaneseq
          %v2500 = vshrl.u32 %v2499, 7
          %v2501 = vsub.s32 0, %v2500
          %v2502 = vrot.slane %v2497, %v2501
          %v2520 = vunpack.c.l.b16 %v2481
          %v2521 = vunpack.c.l.b16 %v2482
          %v2522 = vunpack.c.l.b16 %v2483
          %v2523 = vunpack.c.l.b16 %v2484
          %v2524 = vunpack.c.l.b16 %v2485
          %v2525 = vunpack.c.l.b16 %v2486
          %v2526 = vunpack.c.l.b16 %v2487
          %v2527 = vunpack.c.l.b16 %v2488
          %v2528 = vunpack.c.l.b16 %v2489
          %v2529 = vunpack.c.l.b16 %v2490
          %v2530 = vunpack.c.l.b16 %v2491
          %v2531 = vunpack.c.l.b16 %v2492
          %v2532 = vunpack.c.l.b16 %v2493
          %v2533 = vunpack.c.l.b16 %v2494
          %v2534 = vunpack.c.l.b16 %v2495
          %v2535 = vunpack.c.l.b16 %v2496
          %v2536 = vpack.c.b16 %v2521, %v2520
          %v2537 = vpack.c.b16 %v2523, %v2522
          %v2538 = vpack.c.b16 %v2525, %v2524
          %v2539 = vpack.c.b16 %v2527, %v2526
          %v2540 = vpack.c.b16 %v2529, %v2528
          %v2541 = vpack.c.b16 %v2531, %v2530
          %v2542 = vpack.c.b16 %v2533, %v2532
          %v2543 = vpack.c.b16 %v2535, %v2534
          %2552 = vmatprep.subr.bf16.mxu0 0
          %2553 = vmatpush1.bf16.msra.mxu0 %v2536
          %2554 = vmatprep.subr.bf16.mxu0 0
          %2555 = vmatpush1.bf16.msra.mxu0 %v2537
          %2556 = vmatprep.subr.bf16.mxu0 0
          %2557 = vmatpush1.bf16.msra.mxu0 %v2538
          %2558 = vmatprep.subr.bf16.mxu0 0
          %2559 = vmatpush1.bf16.msra.mxu0 %v2539
          %2560 = vmatprep.subr.bf16.mxu0 0
          %2561 = vmatpush1.bf16.msra.mxu0 %v2540
          %2562 = vmatprep.subr.bf16.mxu0 0
          %2563 = vmatpush1.bf16.msra.mxu0 %v2541
          %2564 = vmatprep.subr.bf16.mxu0 0
          %2565 = vmatpush1.bf16.msra.mxu0 %v2542
          %2566 = vmatprep.subr.bf16.mxu0 0
          %2567 = vmatpush1.bf16.msra.mxu0 %v2543
          %2568 = vmatprep.subr.bf16.mxu0 0
          %2569 = vmatpush1.bf16.msra.mxu0 0
          %2570 = vmatprep.subr.bf16.mxu0 0
          %2571 = vmatpush1.bf16.msra.mxu0 0
          %2572 = vmatprep.subr.bf16.mxu0 0
          %2573 = vmatpush1.bf16.msra.mxu0 0
          %2574 = vmatprep.subr.bf16.mxu0 0
          %2575 = vmatpush1.bf16.msra.mxu0 0
          %2576 = vmatprep.subr.bf16.mxu0 0
          %2577 = vmatpush1.bf16.msra.mxu0 0
          %2578 = vmatprep.subr.bf16.mxu0 0
          %2579 = vmatpush1.bf16.msra.mxu0 0
          %2580 = vmatprep.subr.bf16.mxu0 0
          %2581 = vmatpush1.bf16.msra.mxu0 0
          %2582 = vmatprep.subr.bf16.mxu0 0
          %2583 = vmatpush1.bf16.msra.mxu0 0
          %2584 = vmatprep.mubr.bf16.mxu0 0
          %2585 = vmatmul.mubr.bf16.gmra.mrb[0].mxu0 %v2479
          %v2586 = vpop.f32.mrb[0].mxu0
          %v2587 = vadd.f32 %v2502, %v2586
          %v2588 = vpop.f32.mrb[0].mxu0
          %v2589 = vpop.f32.mrb[0].mxu0
          %v2590 = vadd.f32 %v2502, %v2589
          %v2591 = vpop.f32.mrb[0].mxu0
          %2592 = vmatprep.mubr.bf16.mxu0 0
          %2593 = vmatmul.mubr.bf16.gmra.mrb[0].mxu0 %v2480
          %v2594 = vpop.f32.mrb[0].mxu0
          %v2595 = vadd.f32 %v2502, %v2594
          %v2596 = vpop.f32.mrb[0].mxu0
          %v2597 = vpop.f32.mrb[0].mxu0
          %v2598 = vadd.f32 %v2502, %v2597
          %v2599 = vpop.f32.mrb[0].mxu0
          %2600 = vdwg.mxu0
          %vm2601 = vcmask 7168
          %2602 = vst.msk [vmem:[%s14] sm:$0xff] %vm2601, %v2587
          %2603 = vst.msk [vmem:[%s14 + $0x8] sm:$0xff] %vm2601, %v2590
          %2604 = vst.msk [vmem:[%s14 + $0x10] sm:$0xff] %vm2601, %v2595
          %2605 = vst.msk [vmem:[%s14 + $0x18] sm:$0xff] %vm2601, %v2598
        $region96: #{fno1d_forward_pallas.1} parent=75 // pred_fallthru
          _
        // Predicated region
        $region97: #{fno1d_forward_pallas.1} parent=75 // pred_check
          %p2606 = pneg %p360
        $region98: #{fno1d_forward_pallas.1} parent=75 // pred_check_branch
          %2608 = sbr.rel (%p2606) target = $region100
        $region99: #{fno1d_forward_pallas.1} parent=75 // pred_region
          _
        $region100: #{fno1d_forward_pallas.1} parent=75 // pred_fallthru
          _
        // Predicated region
        $region101: #{fno1d_forward_pallas.1} parent=75 // pred_check
          %p2609 = pneg %p360
        $region102: #{fno1d_forward_pallas.1} parent=75 // pred_check_branch
          %2611 = sbr.rel (%p2609) target = $region104
        $region103: #{fno1d_forward_pallas.1} parent=75 // pred_region
          _
        $region104: #{fno1d_forward_pallas.1} parent=75 // pred_fallthru
          _
      $region76: #{fno1d_forward_pallas.1} parent=5 // pred_fallthru
        _
      %p2612 = scmp.le.s32.totalorder 2, %s28
      // Predicated region
      $region105: #{fno1d_forward_pallas.1} parent=5 // pred_check
        %p2613 = pneg %p2612
      $region106: #{fno1d_forward_pallas.1} parent=5 // pred_check_branch
        %2615 = sbr.rel (%p2613) target = $region108
      $region107: #{fno1d_forward_pallas.1} parent=5 // pred_region
        %s2616 = ssub.s32 %s28, 2
      $region108: #{fno1d_forward_pallas.1} parent=5 // pred_fallthru
        _
    $region6: #{fno1d_forward_pallas.1} parent=1 // loop_footer
      %s32 = sadd.s32 1, %s28
    $region7: #{fno1d_forward_pallas.1} parent=1 // loop_footer_branch
      %27 = sbr.rel target = $region3
    $region8: #{fno1d_forward_pallas.1} parent=1 // loop_exit
      _
    %2617 = vsyncpa [#allocation5], 1
    %s2618 = scalar_lea.sflag [#allocation5], 1
    %2619 = vsyncpa %s2618, 1
    %2620 = vsyncpa [#allocation7], 1
    %s2621 = scalar_lea.sflag [#allocation7], 1
    %2622 = vsyncpa %s2621, 1

</llo_original>
